<compile_context>
chip_gen: v7x
topology: tpu7x:2x2x1
jax: 0.10.0
libtpu: 0.0.40
codegen_flags: <defaults>
</compile_context>

<pallas_src>
import functools

import jax
import jax.numpy as jnp
from jax.experimental import pallas as pl
from jax.experimental.pallas import tpu as pltpu


def _convlstm_kernel(x_ref, h_ref, c_ref, w_ref, b_ref, h_out_ref, c_out_ref,
                     xs_ref, cp_ref, *, hidden_size, input_size, seg, lead, pad):
    # x_ref:     (Bt, C_in, L)        input tile (NCL)
    # h_ref:     (Bt, H, L)           previous hidden tile
    # c_ref:     (Bt, H, L)           previous cell tile
    # w_ref:     (K, 4H, C_pad)       conv weight, per-tap channel order [hidden; input; 0-pad]
    # b_ref:     (4H, 1)              conv bias (f32)
    # h_out_ref: (Bt, H, L)
    # c_out_ref: (Bt, H, L)
    # xs_ref:    (C_pad, Bt*seg + 2*lead)  stacked-input slab (activation dtype)
    # cp_ref:    (H, Bt*seg)               previous cell slab (f32)
    Bt, _, L = x_ref.shape
    H = hidden_size
    C_in = input_size
    C_total = H + C_in
    C_pad, xs_w = xs_ref.shape
    K = w_ref.shape[0]
    cols = Bt * seg
    act_dtype = xs_ref.dtype

    # ---- assemble the stacked [h_prev; x] slab (in-kernel SAME padding) ----
    # Only the channel pad rows and the per-batch halo strips need zeros; all
    # other unwritten columns only ever feed junk gate columns (never read).
    if C_pad > C_total:
        xs_ref[C_total:, :] = jnp.zeros((C_pad - C_total, xs_w), act_dtype)
    for b in range(Bt):
        col0 = lead + b * seg                       # 128-aligned store offset
        xs_ref[:H, col0:col0 + L] = h_ref[b].astype(act_dtype)
        xs_ref[H:C_total, col0:col0 + L] = x_ref[b].astype(act_dtype)
        if pad > 0:
            zero_strip = jnp.zeros((C_pad, pad), act_dtype)
            xs_ref[:, col0 - pad:col0] = zero_strip             # left conv halo
            xs_ref[:, col0 + L:col0 + L + pad] = zero_strip     # right conv halo
        # previous cell state in the same column layout (junk columns unused)
        cp_ref[:, b * seg:b * seg + L] = c_ref[b].astype(jnp.float32)

    # ---- K accumulated MXU matmuls over lane-shifted views (no im2col) ----
    acc = None
    for k in range(K):
        start = lead + k - pad
        part = jnp.dot(w_ref[k], xs_ref[:, start:start + cols],
                       preferred_element_type=jnp.float32)
        acc = part if acc is None else acc + part
    gates = acc + b_ref[...].astype(jnp.float32)                # (4H, Bt*seg) f32

    def _sigmoid(z):
        # sigmoid(x) = 0.5*tanh(0.5*x) + 0.5 : one EUP op, mathematically exact.
        return 0.5 * jnp.tanh(0.5 * z) + 0.5

    # Same gate order as torch: in, remember, out, cell.  (Row offsets k*H are
    # sublane-aligned when H is a multiple of the dtype sublane tile.)
    in_g = _sigmoid(gates[0 * H:1 * H, :])
    rem_g = _sigmoid(gates[1 * H:2 * H, :])
    out_g = _sigmoid(gates[2 * H:3 * H, :])
    cell_g = jnp.tanh(gates[3 * H:4 * H, :])

    # Slab math on the full (H, Bt*seg) width; junk columns never read back.
    cell = rem_g * cp_ref[...] + in_g * cell_g
    hidden = out_g * jnp.tanh(cell)

    for b in range(Bt):
        col0 = b * seg                              # 128-aligned extraction
        h_out_ref[b] = hidden[:, col0:col0 + L].astype(h_out_ref.dtype)
        c_out_ref[b] = cell[:, col0:col0 + L].astype(c_out_ref.dtype)


def convlstm1d_forward(input_, prev_state, weight, bias, hidden_size,
                       kernel_size=3, batch_tile=None, donate_state=False):
    """Matches ConvLSTM1d.forward.

    input_:     (B, C_in, L)        [NCL, same as PyTorch Conv1d]
    prev_state: None or (prev_hidden, prev_cell), each (B, H, L)
    weight:     (4H, C_in + H, K)   [same layout as torch Conv1d.weight]
    bias:       (4H,)
    returns (hidden, cell), each (B, H, L)
    """
    if kernel_size % 2 != 1:
        raise ValueError("ConvLSTM1d Pallas kernel requires odd kernel_size "
                         "(torch-style SAME padding is only symmetric for odd K).")

    B, C_in, L = input_.shape
    H = hidden_size
    K = kernel_size
    pad = (K - 1) // 2
    act_dtype = input_.dtype
    itemsize = jnp.dtype(act_dtype).itemsize
    C_total = C_in + H
    sub_tile = max(8, 32 // itemsize)               # 8 f32 / 16 bf16 / 32 int8
    C_pad = ((C_total + sub_tile - 1) // sub_tile) * sub_tile
    seg = ((L + 2 * pad + 127) // 128) * 128        # per-batch 128-aligned column segment
    lead = max(128, ((pad + 127) // 128) * 128)     # 128-aligned lead so halo reads stay in-bounds

    if prev_state is None:
        prev_hidden = jnp.zeros((B, H, L), act_dtype)
        prev_cell = jnp.zeros((B, H, L), act_dtype)
    else:
        prev_hidden, prev_cell = prev_state
        prev_hidden = prev_hidden.astype(act_dtype)
        prev_cell = prev_cell.astype(act_dtype)

    # Parameter-only re-layout (tiny, one-time): per-tap channel order becomes
    # [hidden; input; zero-pad]; weight cast to the activation dtype so bf16
    # activations use the full-rate bf16 MXU path (accumulation stays f32).
    w_hx = jnp.concatenate([weight[:, C_in:, :], weight[:, :C_in, :]], axis=1)
    if C_pad != C_total:
        w_hx = jnp.pad(w_hx, ((0, 0), (0, C_pad - C_total), (0, 0)))
    w_taps = jnp.transpose(w_hx, (2, 0, 1)).astype(act_dtype)   # (K, 4H, C_pad)
    b_2d = bias.reshape(4 * H, 1).astype(jnp.float32)

    def step_vmem_bytes(bt):
        c = bt * seg
        blocks = 2 * itemsize * bt * L * (C_in + 4 * H)          # double-buffered in/out blocks
        params = 2 * (w_taps.size * itemsize + 4 * H * 4)
        scratch = C_pad * (c + 2 * lead) * itemsize + H * c * 4
        f32_tmp = 12 * H * c * 4                                 # gates + gate/cell/hidden slabs
        return blocks + params + scratch + f32_tmp

    if batch_tile is None:
        divisors = [d for d in range(1, B + 1) if B % d == 0]
        budget = 24 * 2 ** 20                                    # headroom under v7x's 64 MiB VMEM
        fitting = [d for d in divisors
                   if d * seg <= 1024 and step_vmem_bytes(d) <= budget]
        batch_tile = max(fitting) if fitting else 1
        if B >= 2 and B // batch_tile < 2:
            batch_tile = max(d for d in divisors if B // d >= 2)  # >=2 steps -> feed both v7x TCs
    if B % batch_tile != 0:
        raise ValueError(f"batch_tile={batch_tile} must divide B={B}")
    Bt = batch_tile
    cols = Bt * seg

    # TODO(synk): for very long L, additionally tile the length axis with a
    # (K-1) halo as a second "parallel" grid axis instead of relying on batch
    # tiling alone to bound the per-step VMEM working set.

    vmem_limit = int(min(64 * 2 ** 20, max(32 * 2 ** 20, 2 * step_vmem_bytes(Bt))))
    cost = pl.CostEstimate(
        flops=2 * B * L * (4 * H) * (K * C_total) + 10 * B * H * L,
        transcendentals=5 * B * H * L,
        bytes_accessed=itemsize * (B * L * (C_in + 4 * H) + w_taps.size) + 4 * H * 4,
    )

    kernel = functools.partial(_convlstm_kernel, hidden_size=H, input_size=C_in,
                               seg=seg, lead=lead, pad=pad)

    hidden, cell = pl.pallas_call(
        kernel,
        out_shape=(
            jax.ShapeDtypeStruct((B, H, L), act_dtype),
            jax.ShapeDtypeStruct((B, H, L), act_dtype),
        ),
        grid=(B // Bt,),
        in_specs=[
            pl.BlockSpec((Bt, C_in, L), lambda i: (i, 0, 0)),
            pl.BlockSpec((Bt, H, L), lambda i: (i, 0, 0)),
            pl.BlockSpec((Bt, H, L), lambda i: (i, 0, 0)),
            pl.BlockSpec((K, 4 * H, C_pad), lambda i: (0, 0, 0)),
            pl.BlockSpec((4 * H, 1), lambda i: (0, 0)),
        ],
        out_specs=(
            pl.BlockSpec((Bt, H, L), lambda i: (i, 0, 0)),
            pl.BlockSpec((Bt, H, L), lambda i: (i, 0, 0)),
        ),
        scratch_shapes=[
            pltpu.VMEM((C_pad, cols + 2 * lead), act_dtype),     # stacked [h; x] slab
            pltpu.VMEM((H, cols), jnp.float32),                  # previous cell slab
        ],
        input_output_aliases=({1: 0, 2: 1} if donate_state else {}),
        compiler_params=pltpu.CompilerParams(
            dimension_semantics=("parallel",),                   # independent batch tiles
            vmem_limit_bytes=vmem_limit),
        cost_estimate=cost,
    )(input_, prev_hidden, prev_cell, w_taps, b_2d)

    return hidden, cell


def _reference_forward(input_, prev_state, weight, bias, hidden_size, kernel_size=3):
    """Pure-JAX reference (mirrors the torch code) for correctness checking."""
    B, C_in, L = input_.shape
    H = hidden_size
    if prev_state is None:
        prev_hidden = jnp.zeros((B, H, L), input_.dtype)
        prev_cell = jnp.zeros((B, H, L), input_.dtype)
    else:
        prev_hidden, prev_cell = prev_state
    stacked = jnp.concatenate([input_, prev_hidden], axis=1)
    gates = jax.lax.conv_general_dilated(
        stacked, weight, window_strides=(1,), padding="SAME",
        dimension_numbers=("NCH", "OIH", "NCH")) + bias[None, :, None]
    i, r, o, g = jnp.split(gates, 4, axis=1)
    i = jax.nn.sigmoid(i)
    r = jax.nn.sigmoid(r)
    o = jax.nn.sigmoid(o)
    g = jnp.tanh(g)
    cell = r * prev_cell + i * g
    hidden = o * jnp.tanh(cell)
    return hidden, cell


if __name__ == "__main__":
    # Small shapes consistent with the module's forward.
    B, C_in, L, H, K = 2, 4, 16, 32, 3

    key = jax.random.PRNGKey(0)
    k_x, k_h, k_c, k_w, k_b = jax.random.split(key, 5)

    x = jax.random.normal(k_x, (B, C_in, L), jnp.float32)
    prev_h = jax.random.normal(k_h, (B, H, L), jnp.float32)
    prev_c = jax.random.normal(k_c, (B, H, L), jnp.float32)

    # Deterministic parameter init (uniform, same shape/scale as torch Conv1d).
    fan_in = (C_in + H) * K
    bound = 1.0 / jnp.sqrt(jnp.float32(fan_in))
    weight = jax.random.uniform(k_w, (4 * H, C_in + H, K), jnp.float32,
                                minval=-bound, maxval=bound)
    bias = jax.random.uniform(k_b, (4 * H,), jnp.float32,
                              minval=-bound, maxval=bound)

    fwd = jax.jit(functools.partial(convlstm1d_forward,
                                    hidden_size=H, kernel_size=K))
    hidden, cell = fwd(x, (prev_h, prev_c), weight, bias)
    jax.block_until_ready((hidden, cell))

    # Also exercise the prev_state=None branch (zero-initialized state).
    hidden0, cell0 = fwd(x, None, weight, bias)
    jax.block_until_ready((hidden0, cell0))

    # Correctness check vs. pure-JAX reference.
    ref_h, ref_c = _reference_forward(x, (prev_h, prev_c), weight, bias, H, K)
    assert jnp.allclose(hidden, ref_h, atol=2e-5, rtol=2e-5)
    assert jnp.allclose(cell, ref_c, atol=2e-5, rtol=2e-5)
    ref_h0, ref_c0 = _reference_forward(x, None, weight, bias, H, K)
    assert jnp.allclose(hidden0, ref_h0, atol=2e-5, rtol=2e-5)
    assert jnp.allclose(cell0, ref_c0, atol=2e-5, rtol=2e-5)

    print("KERNEL_OK")
</pallas_src>

<mosaic_0001>
module attributes {stable_mosaic.version = 11 : i64} {
  func.func @_convlstm_kernel(%arg0: i32, %arg1: memref<1x4x16xf32, #tpu.memory_space<vmem>>, %arg2: memref<1x32x16xf32, #tpu.memory_space<vmem>>, %arg3: memref<1x32x16xf32, #tpu.memory_space<vmem>>, %arg4: memref<3x128x40xf32, #tpu.memory_space<vmem>>, %arg5: memref<128x1xf32, #tpu.memory_space<vmem>>, %arg6: memref<1x32x16xf32, #tpu.memory_space<vmem>>, %arg7: memref<1x32x16xf32, #tpu.memory_space<vmem>>, %arg8: memref<40x384xf32, #tpu.memory_space<vmem>>, %arg9: memref<32x128xf32, #tpu.memory_space<vmem>>) attributes {dimension_semantics = [#tpu.dimension_semantics<parallel>], iteration_bounds = array<i64: 2>, scalar_prefetch = 0 : i64, scratch_operands = 2 : i64, tpu.core_type = #tpu.core_type<tc>, window_params = [{transform_indices = @transform_0, window_bounds = array<i64: 1, 4, 16>}, {transform_indices = @transform_1, window_bounds = array<i64: 1, 32, 16>}, {transform_indices = @transform_2, window_bounds = array<i64: 1, 32, 16>}, {pipeline_mode = #tpu.pipeline_mode<synchronous>, transform_indices = @transform_3, window_bounds = array<i64: 3, 128, 40>}, {pipeline_mode = #tpu.pipeline_mode<synchronous>, transform_indices = @transform_4, window_bounds = array<i64: 128, 1>}, {transform_indices = @transform_5, window_bounds = array<i64: 1, 32, 16>}, {transform_indices = @transform_6, window_bounds = array<i64: 1, 32, 16>}]} {
    %cst = arith.constant 0.000000e+00 : f32
    %0 = vector.broadcast %cst : f32 to vector<4x384xf32>
    %c36 = arith.constant 36 : index
    %c0 = arith.constant 0 : index
    %1 = vector.load %arg8[%c36, %c0] : memref<40x384xf32, #tpu.memory_space<vmem>>, vector<4x384xf32>
    tpu.vector_store %arg8[%c36, %c0], %0 {strides = array<i32>} : memref<40x384xf32, #tpu.memory_space<vmem>>, vector<4x384xf32>,
    %c0_0 = arith.constant 0 : index
    %c0_1 = arith.constant 0 : index
    %c0_2 = arith.constant 0 : index
    %2 = vector.load %arg2[%c0_0, %c0_1, %c0_2] : memref<1x32x16xf32, #tpu.memory_space<vmem>>, vector<1x32x16xf32>
    %3 = vector.shape_cast %2 : vector<1x32x16xf32> to vector<32x16xf32>
    %c0_3 = arith.constant 0 : index
    %c128 = arith.constant 128 : index
    %4 = vector.load %arg8[%c0_3, %c128] : memref<40x384xf32, #tpu.memory_space<vmem>>, vector<32x16xf32>
    tpu.vector_store %arg8[%c0_3, %c128], %3 {strides = array<i32>} : memref<40x384xf32, #tpu.memory_space<vmem>>, vector<32x16xf32>,
    %c0_4 = arith.constant 0 : index
    %c0_5 = arith.constant 0 : index
    %c0_6 = arith.constant 0 : index
    %5 = vector.load %arg1[%c0_4, %c0_5, %c0_6] : memref<1x4x16xf32, #tpu.memory_space<vmem>>, vector<1x4x16xf32>
    %6 = vector.shape_cast %5 : vector<1x4x16xf32> to vector<4x16xf32>
    %c32 = arith.constant 32 : index
    %c128_7 = arith.constant 128 : index
    %7 = vector.load %arg8[%c32, %c128_7] : memref<40x384xf32, #tpu.memory_space<vmem>>, vector<4x16xf32>
    tpu.vector_store %arg8[%c32, %c128_7], %6 {strides = array<i32>} : memref<40x384xf32, #tpu.memory_space<vmem>>, vector<4x16xf32>,
    %cst_8 = arith.constant 0.000000e+00 : f32
    %8 = vector.broadcast %cst_8 : f32 to vector<40x1xf32>
    %c0_9 = arith.constant 0 : index
    %c127 = arith.constant 127 : index
    %9 = vector.load %arg8[%c0_9, %c127] : memref<40x384xf32, #tpu.memory_space<vmem>>, vector<40x1xf32>
    tpu.vector_store %arg8[%c0_9, %c127], %8 {strides = array<i32>} : memref<40x384xf32, #tpu.memory_space<vmem>>, vector<40x1xf32>,
    %c0_10 = arith.constant 0 : index
    %c144 = arith.constant 144 : index
    %10 = vector.load %arg8[%c0_10, %c144] : memref<40x384xf32, #tpu.memory_space<vmem>>, vector<40x1xf32>
    tpu.vector_store %arg8[%c0_10, %c144], %8 {strides = array<i32>} : memref<40x384xf32, #tpu.memory_space<vmem>>, vector<40x1xf32>,
    %c0_11 = arith.constant 0 : index
    %c0_12 = arith.constant 0 : index
    %c0_13 = arith.constant 0 : index
    %11 = vector.load %arg3[%c0_11, %c0_12, %c0_13] : memref<1x32x16xf32, #tpu.memory_space<vmem>>, vector<1x32x16xf32>
    %12 = vector.shape_cast %11 : vector<1x32x16xf32> to vector<32x16xf32>
    %c0_14 = arith.constant 0 : index
    %c0_15 = arith.constant 0 : index
    %13 = vector.load %arg9[%c0_14, %c0_15] : memref<32x128xf32, #tpu.memory_space<vmem>>, vector<32x16xf32>
    tpu.vector_store %arg9[%c0_14, %c0_15], %12 {strides = array<i32>} : memref<32x128xf32, #tpu.memory_space<vmem>>, vector<32x16xf32>,
    %c0_16 = arith.constant 0 : index
    %c0_17 = arith.constant 0 : index
    %c0_18 = arith.constant 0 : index
    %14 = vector.load %arg4[%c0_16, %c0_17, %c0_18] : memref<3x128x40xf32, #tpu.memory_space<vmem>>, vector<1x128x40xf32>
    %15 = vector.shape_cast %14 : vector<1x128x40xf32> to vector<128x40xf32>
    %c0_19 = arith.constant 0 : index
    %c127_20 = arith.constant 127 : index
    %16 = vector.load %arg8[%c0_19, %c127_20] : memref<40x384xf32, #tpu.memory_space<vmem>>, vector<40x128xf32>
    %cst_21 = arith.constant dense<0.000000e+00> : vector<128x128xf32>
    %17 = tpu.matmul %15, %16, %cst_21 {dimension_numbers = #tpu.dot_dimension_numbers<[1], [0], [0], [1], [0, 0, 1, 1], [], []>} : vector<128x40xf32>, vector<40x128xf32>, vector<128x128xf32> -> vector<128x128xf32>
    %c1 = arith.constant 1 : index
    %c0_22 = arith.constant 0 : index
    %c0_23 = arith.constant 0 : index
    %18 = vector.load %arg4[%c1, %c0_22, %c0_23] : memref<3x128x40xf32, #tpu.memory_space<vmem>>, vector<1x128x40xf32>
    %19 = vector.shape_cast %18 : vector<1x128x40xf32> to vector<128x40xf32>
    %c0_24 = arith.constant 0 : index
    %c128_25 = arith.constant 128 : index
    %20 = vector.load %arg8[%c0_24, %c128_25] : memref<40x384xf32, #tpu.memory_space<vmem>>, vector<40x128xf32>
    %cst_26 = arith.constant dense<0.000000e+00> : vector<128x128xf32>
    %21 = tpu.matmul %19, %20, %cst_26 {dimension_numbers = #tpu.dot_dimension_numbers<[1], [0], [0], [1], [0, 0, 1, 1], [], []>} : vector<128x40xf32>, vector<40x128xf32>, vector<128x128xf32> -> vector<128x128xf32>
    %22 = arith.addf %17, %21 : vector<128x128xf32>
    %c2 = arith.constant 2 : index
    %c0_27 = arith.constant 0 : index
    %c0_28 = arith.constant 0 : index
    %23 = vector.load %arg4[%c2, %c0_27, %c0_28] : memref<3x128x40xf32, #tpu.memory_space<vmem>>, vector<1x128x40xf32>
    %24 = vector.shape_cast %23 : vector<1x128x40xf32> to vector<128x40xf32>
    %c0_29 = arith.constant 0 : index
    %c129 = arith.constant 129 : index
    %25 = vector.load %arg8[%c0_29, %c129] : memref<40x384xf32, #tpu.memory_space<vmem>>, vector<40x128xf32>
    %cst_30 = arith.constant dense<0.000000e+00> : vector<128x128xf32>
    %26 = tpu.matmul %24, %25, %cst_30 {dimension_numbers = #tpu.dot_dimension_numbers<[1], [0], [0], [1], [0, 0, 1, 1], [], []>} : vector<128x40xf32>, vector<40x128xf32>, vector<128x128xf32> -> vector<128x128xf32>
    %27 = arith.addf %22, %26 : vector<128x128xf32>
    %c0_31 = arith.constant 0 : index
    %c0_32 = arith.constant 0 : index
    %28 = vector.load %arg5[%c0_31, %c0_32] : memref<128x1xf32, #tpu.memory_space<vmem>>, vector<128x1xf32>
    %29 = vector.broadcast %28 : vector<128x1xf32> to vector<128x128xf32>
    %30 = arith.addf %27, %29 : vector<128x128xf32>
    %31 = vector.extract_strided_slice %30 {offsets = [0, 0], sizes = [32, 128], strides = [1, 1]} : vector<128x128xf32> to vector<32x128xf32>
    %cst_33 = arith.constant 5.000000e-01 : f32
    %32 = vector.broadcast %cst_33 : f32 to vector<32x128xf32>
    %33 = arith.mulf %32, %31 : vector<32x128xf32>
    %34 = math.tanh %33 : vector<32x128xf32>
    %cst_34 = arith.constant 5.000000e-01 : f32
    %35 = vector.broadcast %cst_34 : f32 to vector<32x128xf32>
    %36 = arith.mulf %35, %34 : vector<32x128xf32>
    %cst_35 = arith.constant 5.000000e-01 : f32
    %37 = vector.broadcast %cst_35 : f32 to vector<32x128xf32>
    %38 = arith.addf %36, %37 : vector<32x128xf32>
    %39 = vector.extract_strided_slice %30 {offsets = [32, 0], sizes = [32, 128], strides = [1, 1]} : vector<128x128xf32> to vector<32x128xf32>
    %cst_36 = arith.constant 5.000000e-01 : f32
    %40 = vector.broadcast %cst_36 : f32 to vector<32x128xf32>
    %41 = arith.mulf %40, %39 : vector<32x128xf32>
    %42 = math.tanh %41 : vector<32x128xf32>
    %cst_37 = arith.constant 5.000000e-01 : f32
    %43 = vector.broadcast %cst_37 : f32 to vector<32x128xf32>
    %44 = arith.mulf %43, %42 : vector<32x128xf32>
    %cst_38 = arith.constant 5.000000e-01 : f32
    %45 = vector.broadcast %cst_38 : f32 to vector<32x128xf32>
    %46 = arith.addf %44, %45 : vector<32x128xf32>
    %47 = vector.extract_strided_slice %30 {offsets = [64, 0], sizes = [32, 128], strides = [1, 1]} : vector<128x128xf32> to vector<32x128xf32>
    %cst_39 = arith.constant 5.000000e-01 : f32
    %48 = vector.broadcast %cst_39 : f32 to vector<32x128xf32>
    %49 = arith.mulf %48, %47 : vector<32x128xf32>
    %50 = math.tanh %49 : vector<32x128xf32>
    %cst_40 = arith.constant 5.000000e-01 : f32
    %51 = vector.broadcast %cst_40 : f32 to vector<32x128xf32>
    %52 = arith.mulf %51, %50 : vector<32x128xf32>
    %cst_41 = arith.constant 5.000000e-01 : f32
    %53 = vector.broadcast %cst_41 : f32 to vector<32x128xf32>
    %54 = arith.addf %52, %53 : vector<32x128xf32>
    %55 = vector.extract_strided_slice %30 {offsets = [96, 0], sizes = [32, 128], strides = [1, 1]} : vector<128x128xf32> to vector<32x128xf32>
    %56 = math.tanh %55 : vector<32x128xf32>
    %c0_42 = arith.constant 0 : index
    %c0_43 = arith.constant 0 : index
    %57 = vector.load %arg9[%c0_42, %c0_43] : memref<32x128xf32, #tpu.memory_space<vmem>>, vector<32x128xf32>
    %58 = arith.mulf %46, %57 : vector<32x128xf32>
    %59 = arith.mulf %38, %56 : vector<32x128xf32>
    %60 = arith.addf %58, %59 : vector<32x128xf32>
    %61 = math.tanh %60 : vector<32x128xf32>
    %62 = arith.mulf %54, %61 : vector<32x128xf32>
    %63 = vector.extract_strided_slice %62 {offsets = [0, 0], sizes = [32, 16], strides = [1, 1]} : vector<32x128xf32> to vector<32x16xf32>
    %c0_44 = arith.constant 0 : index
    %c0_45 = arith.constant 0 : index
    %c0_46 = arith.constant 0 : index
    %64 = vector.load %arg6[%c0_44, %c0_45, %c0_46] : memref<1x32x16xf32, #tpu.memory_space<vmem>>, vector<1x32x16xf32>
    %65 = vector.shape_cast %64 : vector<1x32x16xf32> to vector<32x16xf32>
    %66 = vector.shape_cast %63 : vector<32x16xf32> to vector<1x32x16xf32>
    tpu.vector_store %arg6[%c0_44, %c0_45, %c0_46], %66 {strides = array<i32>} : memref<1x32x16xf32, #tpu.memory_space<vmem>>, vector<1x32x16xf32>,
    %67 = vector.extract_strided_slice %60 {offsets = [0, 0], sizes = [32, 16], strides = [1, 1]} : vector<32x128xf32> to vector<32x16xf32>
    %c0_47 = arith.constant 0 : index
    %c0_48 = arith.constant 0 : index
    %c0_49 = arith.constant 0 : index
    %68 = vector.load %arg7[%c0_47, %c0_48, %c0_49] : memref<1x32x16xf32, #tpu.memory_space<vmem>>, vector<1x32x16xf32>
    %69 = vector.shape_cast %68 : vector<1x32x16xf32> to vector<32x16xf32>
    %70 = vector.shape_cast %67 : vector<32x16xf32> to vector<1x32x16xf32>
    tpu.vector_store %arg7[%c0_47, %c0_48, %c0_49], %70 {strides = array<i32>} : memref<1x32x16xf32, #tpu.memory_space<vmem>>, vector<1x32x16xf32>,
    return
  }
  func.func @transform_0(%arg0: i32) -> (i32, i32, i32) {
    %c0_i32 = arith.constant 0 : i32
    %c0_i32_0 = arith.constant 0 : i32
    %c0_i32_1 = arith.constant 0 : i32
    return %arg0, %c0_i32, %c0_i32_0 : i32, i32, i32
  }
  func.func @transform_1(%arg0: i32) -> (i32, i32, i32) {
    %c0_i32 = arith.constant 0 : i32
    %c0_i32_0 = arith.constant 0 : i32
    %c0_i32_1 = arith.constant 0 : i32
    return %arg0, %c0_i32, %c0_i32_0 : i32, i32, i32
  }
  func.func @transform_2(%arg0: i32) -> (i32, i32, i32) {
    %c0_i32 = arith.constant 0 : i32
    %c0_i32_0 = arith.constant 0 : i32
    %c0_i32_1 = arith.constant 0 : i32
    return %arg0, %c0_i32, %c0_i32_0 : i32, i32, i32
  }
  func.func @transform_3(%arg0: i32) -> (i32, i32, i32) {
    %c0_i32 = arith.constant 0 : i32
    %c0_i32_0 = arith.constant 0 : i32
    %c0_i32_1 = arith.constant 0 : i32
    %c0_i32_2 = arith.constant 0 : i32
    return %c0_i32, %c0_i32_0, %c0_i32_1 : i32, i32, i32
  }
  func.func @transform_4(%arg0: i32) -> (i32, i32) {
    %c0_i32 = arith.constant 0 : i32
    %c0_i32_0 = arith.constant 0 : i32
    %c0_i32_1 = arith.constant 0 : i32
    return %c0_i32, %c0_i32_0 : i32, i32
  }
  func.func @transform_5(%arg0: i32) -> (i32, i32, i32) {
    %c0_i32 = arith.constant 0 : i32
    %c0_i32_0 = arith.constant 0 : i32
    %c0_i32_1 = arith.constant 0 : i32
    return %arg0, %c0_i32, %c0_i32_0 : i32, i32, i32
  }
  func.func @transform_6(%arg0: i32) -> (i32, i32, i32) {
    %c0_i32 = arith.constant 0 : i32
    %c0_i32_0 = arith.constant 0 : i32
    %c0_i32_1 = arith.constant 0 : i32
    return %arg0, %c0_i32, %c0_i32_0 : i32, i32, i32
  }
}

</mosaic_0001>

<llo_original>
// kernel: convlstm1d_forward.1
$region0: #{convlstm1d_forward.1}
  #allocation0 [shape = 'u32[]', space=smem, size = 0x4, offset = 0x4, fixed_abs, tag = 'smem constant byte address 0x4 - core index']
  #allocation1 [shape = 'u32[144,128]{1,0:T(1,128)}', space=vmem, size = 0x12000, scoped, tag = 'internal scratch']
  #allocation2 [shape = 'f32[40,384]{1,0:T(8,128)}', space=vmem, size = 0xf000, scoped, tag = 'scratch operand']
  #allocation3 [shape = 'f32[32,128]{1,0:T(8,128)}', space=vmem, size = 0x4000, scoped, tag = 'scratch operand']
  %s0 = inlined_call_operand.vmem [shape: f32[2,4,16], index: 0, kind: input, shape index: {}]
  %s1 = inlined_call_operand.vmem [shape: f32[2,32,16], index: 1, kind: input, shape index: {}]
  %s2 = inlined_call_operand.vmem [shape: f32[2,32,16], index: 2, kind: input, shape index: {}]
  %s3 = inlined_call_operand.vmem [shape: f32[3,128,40], index: 3, kind: input, shape index: {}]
  %s4 = inlined_call_operand.vmem [shape: f32[128,1], index: 4, kind: input, shape index: {}]
  %s5 = inlined_call_operand.vmem [shape: f32[2,32,16], index: 5, kind: output, shape index: {0}]
  %s6 = inlined_call_operand.vmem [shape: f32[2,32,16], index: 6, kind: output, shape index: {1}]
  %7 = xla_tuple %s5, %s6
  %s8 = sld [smem:[#allocation0]]
  $region61: #{convlstm1d_forward.1} parent=0
    _
  %s10 = ssub.s32 1, %s8
  %s11 = scalar_select 0, %s10, %s8
  loop: start=0, step=1, limit=4
  $region2: #{convlstm1d_forward.1} parent=0 // loop_pre_header
    _
  $region3: #{convlstm1d_forward.1} parent=0 // loop_header
    %s13 = sphi 0, %s17
    %p14 = scmp.ge.s32.totalorder %s13, 4
    %s23 = sphi 0, %s25
    %s26 = sphi 0, %s23
    %s27 = sphi 0, %s26
    %s43 = sphi 0, %s27
    %s49 = sphi 0, %s51
    %s52 = sphi 0, %s49
    %s53 = sphi 0, %s52
    %s69 = sphi 0, %s53
    %s75 = sphi 0, %s77
    %s78 = sphi 0, %s75
    %s79 = sphi 0, %s78
    %s95 = sphi 0, %s79
    %s99 = sphi 0, %s99
    %s101 = sphi 0, %s99
    %s102 = sphi 0, %s101
    %s116 = sphi 0, %s102
    %s120 = sphi 0, %s120
    %s122 = sphi 0, %s120
    %s123 = sphi 0, %s122
    %s137 = sphi 0, %s123
    %s143 = sphi 0, %s145
    %s146 = sphi 0, %s143
    %s147 = sphi 0, %s146
    %s163 = sphi 0, %s147
    %s169 = sphi 0, %s171
    %s172 = sphi 0, %s169
    %s173 = sphi 0, %s172
    %s189 = sphi 0, %s173
  $region4: #{convlstm1d_forward.1} parent=0 // loop_header_branch
    %16 = sbr.rel (%p14) target = $region8
  $region5: #{convlstm1d_forward.1} parent=0 // loop_body
    %s18 = ssub.s32 %s13, 1
    %s19 = ssub.s32 %s13, 2
    %s20 = sadd.s32 %s13, 1
    %s21 = ssub.s32 %s13, %s20
    %p22 = scmp.eq.s32.totalorder %s21, 0
    %s24 = sadd.s32 %s23, 1
    %s25 = scalar_select %p22, %s23, %s24
    %p28 = pneg %p22
    %p29 = scmp.eq.s32.totalorder %s13, 1
    %p30 = por %p28, %p29
    %p31 = scmp.ne.s32.totalorder %s23, %s26
    %p32 = scmp.eq.s32.totalorder %s13, 0
    %p33 = por %p31, %p32
    %p34 = scmp.ne.s32.totalorder %s23, %s26
    %p35 = scmp.eq.s32.totalorder %s18, 1
    %p36 = por %p34, %p35
    %p37 = scmp.ne.s32.totalorder %s26, %s27
    %p38 = scmp.eq.s32.totalorder %s18, 0
    %p39 = por %p37, %p38
    %p40 = scmp.ne.s32.totalorder %s26, %s27
    %p41 = scmp.eq.s32.totalorder %s19, 1
    %p42 = por %p40, %p41
    %p44 = scmp.ne.s32.totalorder %s27, %s43
    %p45 = scmp.eq.s32.totalorder %s19, 0
    %p46 = por %p44, %p45
    %s47 = ssub.s32 %s13, %s20
    %p48 = scmp.eq.s32.totalorder %s47, 0
    %s50 = sadd.s32 %s49, 1
    %s51 = scalar_select %p48, %s49, %s50
    %p54 = pneg %p48
    %p55 = scmp.eq.s32.totalorder %s13, 1
    %p56 = por %p54, %p55
    %p57 = scmp.ne.s32.totalorder %s49, %s52
    %p58 = scmp.eq.s32.totalorder %s13, 0
    %p59 = por %p57, %p58
    %p60 = scmp.ne.s32.totalorder %s49, %s52
    %p61 = scmp.eq.s32.totalorder %s18, 1
    %p62 = por %p60, %p61
    %p63 = scmp.ne.s32.totalorder %s52, %s53
    %p64 = scmp.eq.s32.totalorder %s18, 0
    %p65 = por %p63, %p64
    %p66 = scmp.ne.s32.totalorder %s52, %s53
    %p67 = scmp.eq.s32.totalorder %s19, 1
    %p68 = por %p66, %p67
    %p70 = scmp.ne.s32.totalorder %s53, %s69
    %p71 = scmp.eq.s32.totalorder %s19, 0
    %p72 = por %p70, %p71
    %s73 = ssub.s32 %s13, %s20
    %p74 = scmp.eq.s32.totalorder %s73, 0
    %s76 = sadd.s32 %s75, 1
    %s77 = scalar_select %p74, %s75, %s76
    %p80 = pneg %p74
    %p81 = scmp.eq.s32.totalorder %s13, 1
    %p82 = por %p80, %p81
    %p83 = scmp.ne.s32.totalorder %s75, %s78
    %p84 = scmp.eq.s32.totalorder %s13, 0
    %p85 = por %p83, %p84
    %p86 = scmp.ne.s32.totalorder %s75, %s78
    %p87 = scmp.eq.s32.totalorder %s18, 1
    %p88 = por %p86, %p87
    %p89 = scmp.ne.s32.totalorder %s78, %s79
    %p90 = scmp.eq.s32.totalorder %s18, 0
    %p91 = por %p89, %p90
    %p92 = scmp.ne.s32.totalorder %s78, %s79
    %p93 = scmp.eq.s32.totalorder %s19, 1
    %p94 = por %p92, %p93
    %p96 = scmp.ne.s32.totalorder %s79, %s95
    %p97 = scmp.eq.s32.totalorder %s19, 0
    %p98 = por %p96, %p97
    %s100 = sadd.s32 %s99, 1
    %p103 = scmp.eq.s32.totalorder %s13, 1
    %p104 = scmp.ne.s32.totalorder %s99, %s101
    %p105 = scmp.eq.s32.totalorder %s13, 0
    %p106 = por %p104, %p105
    %p107 = scmp.ne.s32.totalorder %s99, %s101
    %p108 = scmp.eq.s32.totalorder %s18, 1
    %p109 = por %p107, %p108
    %p110 = scmp.ne.s32.totalorder %s101, %s102
    %p111 = scmp.eq.s32.totalorder %s18, 0
    %p112 = por %p110, %p111
    %p113 = scmp.ne.s32.totalorder %s101, %s102
    %p114 = scmp.eq.s32.totalorder %s19, 1
    %p115 = por %p113, %p114
    %p117 = scmp.ne.s32.totalorder %s102, %s116
    %p118 = scmp.eq.s32.totalorder %s19, 0
    %p119 = por %p117, %p118
    %s121 = sadd.s32 %s120, 1
    %p124 = scmp.eq.s32.totalorder %s13, 1
    %p125 = scmp.ne.s32.totalorder %s120, %s122
    %p126 = scmp.eq.s32.totalorder %s13, 0
    %p127 = por %p125, %p126
    %p128 = scmp.ne.s32.totalorder %s120, %s122
    %p129 = scmp.eq.s32.totalorder %s18, 1
    %p130 = por %p128, %p129
    %p131 = scmp.ne.s32.totalorder %s122, %s123
    %p132 = scmp.eq.s32.totalorder %s18, 0
    %p133 = por %p131, %p132
    %p134 = scmp.ne.s32.totalorder %s122, %s123
    %p135 = scmp.eq.s32.totalorder %s19, 1
    %p136 = por %p134, %p135
    %p138 = scmp.ne.s32.totalorder %s123, %s137
    %p139 = scmp.eq.s32.totalorder %s19, 0
    %p140 = por %p138, %p139
    %s141 = ssub.s32 %s13, %s20
    %p142 = scmp.eq.s32.totalorder %s141, 0
    %s144 = sadd.s32 %s143, 1
    %s145 = scalar_select %p142, %s143, %s144
    %p148 = pneg %p142
    %p149 = scmp.eq.s32.totalorder %s13, 1
    %p150 = por %p148, %p149
    %p151 = scmp.ne.s32.totalorder %s143, %s146
    %p152 = scmp.eq.s32.totalorder %s13, 0
    %p153 = por %p151, %p152
    %p154 = scmp.ne.s32.totalorder %s143, %s146
    %p155 = scmp.eq.s32.totalorder %s18, 1
    %p156 = por %p154, %p155
    %p157 = scmp.ne.s32.totalorder %s146, %s147
    %p158 = scmp.eq.s32.totalorder %s18, 0
    %p159 = por %p157, %p158
    %p160 = scmp.ne.s32.totalorder %s146, %s147
    %p161 = scmp.eq.s32.totalorder %s19, 1
    %p162 = por %p160, %p161
    %p164 = scmp.ne.s32.totalorder %s147, %s163
    %p165 = scmp.eq.s32.totalorder %s19, 0
    %p166 = por %p164, %p165
    %s167 = ssub.s32 %s13, %s20
    %p168 = scmp.eq.s32.totalorder %s167, 0
    %s170 = sadd.s32 %s169, 1
    %s171 = scalar_select %p168, %s169, %s170
    %p174 = pneg %p168
    %p175 = scmp.eq.s32.totalorder %s13, 1
    %p176 = por %p174, %p175
    %p177 = scmp.ne.s32.totalorder %s169, %s172
    %p178 = scmp.eq.s32.totalorder %s13, 0
    %p179 = por %p177, %p178
    %p180 = scmp.ne.s32.totalorder %s169, %s172
    %p181 = scmp.eq.s32.totalorder %s18, 1
    %p182 = por %p180, %p181
    %p183 = scmp.ne.s32.totalorder %s172, %s173
    %p184 = scmp.eq.s32.totalorder %s18, 0
    %p185 = por %p183, %p184
    %p186 = scmp.ne.s32.totalorder %s172, %s173
    %p187 = scmp.eq.s32.totalorder %s19, 1
    %p188 = por %p186, %p187
    %p190 = scmp.ne.s32.totalorder %s173, %s189
    %p191 = scmp.eq.s32.totalorder %s19, 0
    %p192 = por %p190, %p191
    %p193 = scmp.le.s32.totalorder 1, %s13
    %p194 = scmp.lt.s32.totalorder %s13, 3
    %p195 = pnand %p193, %p194
    %p196 = pneg %p195
    // Predicated region
    $region9: #{convlstm1d_forward.1} parent=5 // pred_check
      _
    $region10: #{convlstm1d_forward.1} parent=5 // pred_check_branch
      %198 = sbr.rel (%p195) target = $region12
    $region11: #{convlstm1d_forward.1} parent=5 // pred_region
      %s199 = ssub.s32 %s13, 1
      // Predicated region
      $region13: #{convlstm1d_forward.1} parent=11 // pred_check
        %p200 = pneg %p112
      $region14: #{convlstm1d_forward.1} parent=11 // pred_check_branch
        %202 = sbr.rel (%p200) target = $region16
      $region15: #{convlstm1d_forward.1} parent=11 // pred_region
        _
      $region16: #{convlstm1d_forward.1} parent=11 // pred_fallthru
        _
      // Predicated region
      $region17: #{convlstm1d_forward.1} parent=11 // pred_check
        %p203 = pneg %p133
      $region18: #{convlstm1d_forward.1} parent=11 // pred_check_branch
        %205 = sbr.rel (%p203) target = $region20
      $region19: #{convlstm1d_forward.1} parent=11 // pred_region
        _
      $region20: #{convlstm1d_forward.1} parent=11 // pred_fallthru
        _
    $region12: #{convlstm1d_forward.1} parent=5 // pred_fallthru
      _
    %p206 = scmp.lt.s32.totalorder %s13, 2
    // Predicated region
    $region21: #{convlstm1d_forward.1} parent=5 // pred_check
      %p207 = pneg %p206
    $region22: #{convlstm1d_forward.1} parent=5 // pred_check_branch
      %209 = sbr.rel (%p207) target = $region24
    $region23: #{convlstm1d_forward.1} parent=5 // pred_region
      // Predicated region
      $region25: #{convlstm1d_forward.1} parent=23 // pred_check
        %p210 = pneg %p33
      $region26: #{convlstm1d_forward.1} parent=23 // pred_check_branch
        %212 = sbr.rel (%p210) target = $region28
      $region27: #{convlstm1d_forward.1} parent=23 // pred_region
        %p213 = scmp.lt.s32.totalorder %s13, 1
        %s214 = scalar_select %p213, %s13, 1
        %s215 = smul.addr %s214, 4
        %s216 = scalar_lea.vmem %s0, %s215
      $region28: #{convlstm1d_forward.1} parent=23 // pred_fallthru
        _
      // Predicated region
      $region29: #{convlstm1d_forward.1} parent=23 // pred_check
        %p217 = pneg %p59
      $region30: #{convlstm1d_forward.1} parent=23 // pred_check_branch
        %219 = sbr.rel (%p217) target = $region32
      $region31: #{convlstm1d_forward.1} parent=23 // pred_region
        %p220 = scmp.lt.s32.totalorder %s13, 1
        %s221 = scalar_select %p220, %s13, 1
        %s222 = smul.addr %s221, 4
        %s223 = smul.addr %s222, 8
        %s224 = scalar_lea.vmem %s1, %s223
      $region32: #{convlstm1d_forward.1} parent=23 // pred_fallthru
        _
      // Predicated region
      $region33: #{convlstm1d_forward.1} parent=23 // pred_check
        %p225 = pneg %p85
      $region34: #{convlstm1d_forward.1} parent=23 // pred_check_branch
        %227 = sbr.rel (%p225) target = $region36
      $region35: #{convlstm1d_forward.1} parent=23 // pred_region
        %p228 = scmp.lt.s32.totalorder %s13, 1
        %s229 = scalar_select %p228, %s13, 1
        %s230 = smul.addr %s229, 4
        %s231 = smul.addr %s230, 8
        %s232 = scalar_lea.vmem %s2, %s231
      $region36: #{convlstm1d_forward.1} parent=23 // pred_fallthru
        _
    $region24: #{convlstm1d_forward.1} parent=5 // pred_fallthru
      _
    %p233 = scmp.le.s32.totalorder 1, %s13
    %p234 = scmp.lt.s32.totalorder %s13, 3
    %p235 = pnand %p233, %p234
    %p236 = pneg %p235
    // Predicated region
    $region37: #{convlstm1d_forward.1} parent=5 // pred_check
      _
    $region38: #{convlstm1d_forward.1} parent=5 // pred_check_branch
      %238 = sbr.rel (%p235) target = $region40
    $region39: #{convlstm1d_forward.1} parent=5 // pred_region
      %s239 = ssub.s32 %s13, 1
      %p240 = scmp.lt.s32.totalorder %s18, 1
      %s241 = scalar_select %p240, %s18, 1
      %s242 = smul.addr %s241, 4
      %s243 = scalar_lea.vmem %s0, %s242
      %p244 = pneg %p39
      %p245 = pneg %p36
      %p246 = scmp.lt.s32.totalorder %s18, 1
      %s247 = scalar_select %p246, %s18, 1
      %s248 = smul.addr %s247, 4
      %s249 = smul.addr %s248, 8
      %s250 = scalar_lea.vmem %s1, %s249
      %p251 = pneg %p65
      %p252 = pneg %p62
      %p253 = scmp.lt.s32.totalorder %s18, 1
      %s254 = scalar_select %p253, %s18, 1
      %s255 = smul.addr %s254, 4
      %s256 = smul.addr %s255, 8
      %s257 = scalar_lea.vmem %s2, %s256
      %p258 = pneg %p91
      %p259 = pneg %p88
      %p260 = pneg %p112
      %p261 = pneg %p109
      %p262 = pneg %p133
      %p263 = pneg %p130
      %p264 = pneg %p159
      %p265 = pneg %p156
      %p266 = scmp.lt.s32.totalorder %s18, 1
      %s267 = scalar_select %p266, %s18, 1
      %s268 = smul.addr %s267, 4
      %s269 = smul.addr %s268, 8
      %s270 = scalar_lea.vmem %s5, %s269
      %p271 = pneg %p185
      %p272 = pneg %p182
      %p273 = scmp.lt.s32.totalorder %s18, 1
      %s274 = scalar_select %p273, %s18, 1
      %s275 = smul.addr %s274, 4
      %s276 = smul.addr %s275, 8
      %s277 = scalar_lea.vmem %s6, %s276
      %p278 = scmp.lt.s32.totalorder %s18, 1
      %s279 = scalar_select %p278, %s18, 1
      %s280 = smul.addr %s279, 4
      %s281 = scalar_lea.vmem %s0, %s280
      %p282 = scmp.lt.s32.totalorder %s18, 1
      %s283 = scalar_select %p282, %s18, 1
      %s284 = smul.addr %s283, 4
      %s285 = smul.addr %s284, 8
      %s286 = scalar_lea.vmem %s1, %s285
      %p287 = scmp.lt.s32.totalorder %s18, 1
      %s288 = scalar_select %p287, %s18, 1
      %s289 = smul.addr %s288, 4
      %s290 = smul.addr %s289, 8
      %s291 = scalar_lea.vmem %s2, %s290
      %p292 = scmp.lt.s32.totalorder %s18, 1
      %s293 = scalar_select %p292, %s18, 1
      %s294 = smul.addr %s293, 4
      %s295 = smul.addr %s294, 8
      %s296 = scalar_lea.vmem %s5, %s295
      %p297 = scmp.lt.s32.totalorder %s18, 1
      %s298 = scalar_select %p297, %s18, 1
      %s299 = smul.addr %s298, 4
      %s300 = smul.addr %s299, 8
      %s301 = scalar_lea.vmem %s6, %s300
      %302 = vst [vmem:[#allocation2 + $0x60] sm:$0xf0] 0.0
      %303 = vst [vmem:[#allocation2 + $0x68] sm:$0xf0] 0.0
      %304 = vst [vmem:[#allocation2 + $0x70] sm:$0xf0] 0.0
      %v305 = vld [vmem:[%s286] sm:$0xff]
      %v306 = vld [vmem:[%s286 + $0x8] sm:$0xff]
      %v307 = vld [vmem:[%s286 + $0x10] sm:$0xff]
      %v308 = vld [vmem:[%s286 + $0x18] sm:$0xff]
      %vm309 = vcmask 130048
      %310 = vst.msk [vmem:[#allocation2 + $0x8] sm:$0xff] %vm309, %v305
      %311 = vst.msk [vmem:[#allocation2 + $0x20] sm:$0xff] %vm309, %v306
      %312 = vst.msk [vmem:[#allocation2 + $0x38] sm:$0xff] %vm309, %v307
      %313 = vst.msk [vmem:[#allocation2 + $0x50] sm:$0xff] %vm309, %v308
      %v314 = vld [vmem:[%s281] sm:$0xf]
      %vm315 = vcmask 125952
      %316 = vst.msk [vmem:[#allocation2 + $0x68] sm:$0xf] %vm315, %v314
      %vm317 = vcmask 1048568
      %318 = vst.msk [vmem:[#allocation2] sm:$0xff] %vm317, 0.0
      %319 = vst.msk [vmem:[#allocation2 + $0x18] sm:$0xff] %vm317, 0.0
      %320 = vst.msk [vmem:[#allocation2 + $0x30] sm:$0xff] %vm317, 0.0
      %321 = vst.msk [vmem:[#allocation2 + $0x48] sm:$0xff] %vm317, 0.0
      %322 = vst.msk [vmem:[#allocation2 + $0x60] sm:$0xff] %vm317, 0.0
      %vm323 = vcmask 138368
      %324 = vst.msk [vmem:[#allocation2 + $0x8] sm:$0xff] %vm323, 0.0
      %325 = vst.msk [vmem:[#allocation2 + $0x20] sm:$0xff] %vm323, 0.0
      %326 = vst.msk [vmem:[#allocation2 + $0x38] sm:$0xff] %vm323, 0.0
      %327 = vst.msk [vmem:[#allocation2 + $0x50] sm:$0xff] %vm323, 0.0
      %328 = vst.msk [vmem:[#allocation2 + $0x68] sm:$0xff] %vm323, 0.0
      %v329 = vld [vmem:[%s291] sm:$0xff]
      %v330 = vld [vmem:[%s291 + $0x8] sm:$0xff]
      %v331 = vld [vmem:[%s291 + $0x10] sm:$0xff]
      %v332 = vld [vmem:[%s291 + $0x18] sm:$0xff]
      %333 = vst.msk [vmem:[#allocation3] sm:$0xff] %vm309, %v329
      %334 = vst.msk [vmem:[#allocation3 + $0x8] sm:$0xff] %vm309, %v330
      %335 = vst.msk [vmem:[#allocation3 + $0x10] sm:$0xff] %vm309, %v331
      %336 = vst.msk [vmem:[#allocation3 + $0x18] sm:$0xff] %vm309, %v332
      %v337 = vld [vmem:[%s3] sm:$0xff]
      %v338 = vld [vmem:[%s3 + $0x8] sm:$0xff]
      %v339 = vld [vmem:[%s3 + $0x10] sm:$0xff]
      %v340 = vld [vmem:[%s3 + $0x18] sm:$0xff]
      %v341 = vld [vmem:[%s3 + $0x20] sm:$0xff]
      %v342 = vld [vmem:[%s3 + $0x28] sm:$0xff]
      %v343 = vld [vmem:[%s3 + $0x30] sm:$0xff]
      %v344 = vld [vmem:[%s3 + $0x38] sm:$0xff]
      %v345 = vld [vmem:[%s3 + $0x40] sm:$0xff]
      %v346 = vld [vmem:[%s3 + $0x48] sm:$0xff]
      %v347 = vld [vmem:[%s3 + $0x50] sm:$0xff]
      %v348 = vld [vmem:[%s3 + $0x58] sm:$0xff]
      %v349 = vld [vmem:[%s3 + $0x60] sm:$0xff]
      %v350 = vld [vmem:[%s3 + $0x68] sm:$0xff]
      %v351 = vld [vmem:[%s3 + $0x70] sm:$0xff]
      %v352 = vld [vmem:[%s3 + $0x78] sm:$0xff]
      %v353 = vld [vmem:[#allocation2] sm:$0xff]
      %v354 = vld [vmem:[#allocation2 + $0x8] sm:$0xff]
      %v355 = vld [vmem:[#allocation2 + $0x18] sm:$0xff]
      %v356 = vld [vmem:[#allocation2 + $0x20] sm:$0xff]
      %v357 = vld [vmem:[#allocation2 + $0x30] sm:$0xff]
      %v358 = vld [vmem:[#allocation2 + $0x38] sm:$0xff]
      %v359 = vld [vmem:[#allocation2 + $0x48] sm:$0xff]
      %v360 = vld [vmem:[#allocation2 + $0x50] sm:$0xff]
      %v361 = vld [vmem:[#allocation2 + $0x60] sm:$0xff]
      %v362 = vld [vmem:[#allocation2 + $0x68] sm:$0xff]
      %s363 = scalar_lea.vmem %s3, 128
      %v364 = vld [vmem:[%s363] sm:$0xff]
      %v365 = vld [vmem:[%s363 + $0x8] sm:$0xff]
      %v366 = vld [vmem:[%s363 + $0x10] sm:$0xff]
      %v367 = vld [vmem:[%s363 + $0x18] sm:$0xff]
      %v368 = vld [vmem:[%s363 + $0x20] sm:$0xff]
      %v369 = vld [vmem:[%s363 + $0x28] sm:$0xff]
      %v370 = vld [vmem:[%s363 + $0x30] sm:$0xff]
      %v371 = vld [vmem:[%s363 + $0x38] sm:$0xff]
      %v372 = vld [vmem:[%s363 + $0x40] sm:$0xff]
      %v373 = vld [vmem:[%s363 + $0x48] sm:$0xff]
      %v374 = vld [vmem:[%s363 + $0x50] sm:$0xff]
      %v375 = vld [vmem:[%s363 + $0x58] sm:$0xff]
      %v376 = vld [vmem:[%s363 + $0x60] sm:$0xff]
      %v377 = vld [vmem:[%s363 + $0x68] sm:$0xff]
      %v378 = vld [vmem:[%s363 + $0x70] sm:$0xff]
      %v379 = vld [vmem:[%s363 + $0x78] sm:$0xff]
      %vm380 = vcmask 326656
      %v382 = vsel %vm380, %v364, 0
      %v385 = vsel %vm380, %v365, 0
      %v388 = vsel %vm380, %v366, 0
      %v391 = vsel %vm380, %v367, 0
      %v394 = vsel %vm380, %v368, 0
      %v397 = vsel %vm380, %v369, 0
      %v400 = vsel %vm380, %v370, 0
      %v403 = vsel %vm380, %v371, 0
      %v406 = vsel %vm380, %v372, 0
      %v409 = vsel %vm380, %v373, 0
      %v412 = vsel %vm380, %v374, 0
      %v415 = vsel %vm380, %v375, 0
      %v418 = vsel %vm380, %v376, 0
      %v421 = vsel %vm380, %v377, 0
      %v424 = vsel %vm380, %v378, 0
      %v427 = vsel %vm380, %v379, 0
      %429 = vmatprep.subr.mxu0 0.0
      %430 = vmatpush1.msra.mxu0 %v354
      %431 = vmatprep.subr.mxu0 0.0
      %432 = vmatpush1.msra.mxu0 %v356
      %433 = vmatprep.subr.mxu0 0.0
      %434 = vmatpush1.msra.mxu0 %v358
      %435 = vmatprep.subr.mxu0 0.0
      %436 = vmatpush1.msra.mxu0 %v360
      %437 = vmatprep.subr.mxu0 0.0
      %438 = vmatpush1.msra.mxu0 %v362
      %439 = vmatprep.subr.mxu0 0.0
      %440 = vmatpush1.msra.mxu0 0.0
      %441 = vmatprep.subr.mxu0 0.0
      %442 = vmatpush1.msra.mxu0 0.0
      %443 = vmatprep.subr.mxu0 0.0
      %444 = vmatpush1.msra.mxu0 0.0
      %445 = vmatprep.subr.mxu0 0.0
      %446 = vmatpush1.msra.mxu0 0.0
      %447 = vmatprep.subr.mxu0 0.0
      %448 = vmatpush1.msra.mxu0 0.0
      %449 = vmatprep.subr.mxu0 0.0
      %450 = vmatpush1.msra.mxu0 0.0
      %451 = vmatprep.subr.mxu0 0.0
      %452 = vmatpush1.msra.mxu0 0.0
      %453 = vmatprep.subr.mxu0 0.0
      %454 = vmatpush1.msra.mxu0 0.0
      %455 = vmatprep.subr.mxu0 0.0
      %456 = vmatpush1.msra.mxu0 0.0
      %457 = vmatprep.subr.mxu0 0.0
      %458 = vmatpush1.msra.mxu0 0.0
      %459 = vmatprep.subr.mxu0 0.0
      %460 = vmatpush1.msra.mxu0 0.0
      %461 = vmatprep.subr.mxu0 0.0
      %462 = vmatpush1.msra.mxu0 0.0
      %463 = vmatprep.subr.mxu0 0.0
      %464 = vmatpush1.msra.mxu0 0.0
      %465 = vmatprep.subr.mxu0 0.0
      %466 = vmatpush1.msra.mxu0 0.0
      %467 = vmatprep.subr.mxu0 0.0
      %468 = vmatpush1.msra.mxu0 0.0
      %469 = vmatprep.subr.mxu0 0.0
      %470 = vmatpush1.msra.mxu0 0.0
      %471 = vmatprep.subr.mxu0 0.0
      %472 = vmatpush1.msra.mxu0 0.0
      %473 = vmatprep.subr.mxu0 0.0
      %474 = vmatpush1.msra.mxu0 0.0
      %475 = vmatprep.subr.mxu0 0.0
      %476 = vmatpush1.msra.mxu0 0.0
      %477 = vmatprep.subr.mxu0 0.0
      %478 = vmatpush1.msra.mxu0 0.0
      %479 = vmatprep.subr.mxu0 0.0
      %480 = vmatpush1.msra.mxu0 0.0
      %481 = vmatprep.subr.mxu0 0.0
      %482 = vmatpush1.msra.mxu0 0.0
      %483 = vmatprep.subr.mxu0 0.0
      %484 = vmatpush1.msra.mxu0 0.0
      %485 = vmatprep.subr.mxu0 0.0
      %486 = vmatpush1.msra.mxu0 0.0
      %487 = vmatprep.subr.mxu0 0.0
      %488 = vmatpush1.msra.mxu0 0.0
      %489 = vmatprep.subr.mxu0 0.0
      %490 = vmatpush1.msra.mxu0 0.0
      %491 = vmatprep.subr.mxu0 0.0
      %492 = vmatpush1.msra.mxu0 0.0
      %493 = vmatprep.mubr.f32.mxu0 0.0
      %494 = vmatmul.mubr.f32.gmra.mrb[0].mxu0 %v382
      %v495 = vpop.f32.mrb[0].mxu0
      %v496 = vadd.f32 0.0, %v495
      %v497 = vpop.f32.mrb[0].mxu0
      %498 = vmatprep.mubr.f32.mxu0 0.0
      %499 = vmatmul.mubr.f32.gmra.mrb[0].mxu0 %v385
      %v500 = vpop.f32.mrb[0].mxu0
      %v501 = vadd.f32 0.0, %v500
      %v502 = vpop.f32.mrb[0].mxu0
      %503 = vmatprep.mubr.f32.mxu0 0.0
      %504 = vmatmul.mubr.f32.gmra.mrb[0].mxu0 %v388
      %v505 = vpop.f32.mrb[0].mxu0
      %v506 = vadd.f32 0.0, %v505
      %v507 = vpop.f32.mrb[0].mxu0
      %508 = vmatprep.mubr.f32.mxu0 0.0
      %509 = vmatmul.mubr.f32.gmra.mrb[0].mxu0 %v391
      %v510 = vpop.f32.mrb[0].mxu0
      %v511 = vadd.f32 0.0, %v510
      %v512 = vpop.f32.mrb[0].mxu0
      %513 = vmatprep.mubr.f32.mxu0 0.0
      %514 = vmatmul.mubr.f32.gmra.mrb[0].mxu0 %v394
      %v515 = vpop.f32.mrb[0].mxu0
      %v516 = vadd.f32 0.0, %v515
      %v517 = vpop.f32.mrb[0].mxu0
      %518 = vmatprep.mubr.f32.mxu0 0.0
      %519 = vmatmul.mubr.f32.gmra.mrb[0].mxu0 %v397
      %v520 = vpop.f32.mrb[0].mxu0
      %v521 = vadd.f32 0.0, %v520
      %v522 = vpop.f32.mrb[0].mxu0
      %523 = vmatprep.mubr.f32.mxu0 0.0
      %524 = vmatmul.mubr.f32.gmra.mrb[0].mxu0 %v400
      %v525 = vpop.f32.mrb[0].mxu0
      %v526 = vadd.f32 0.0, %v525
      %v527 = vpop.f32.mrb[0].mxu0
      %528 = vmatprep.mubr.f32.mxu0 0.0
      %529 = vmatmul.mubr.f32.gmra.mrb[0].mxu0 %v403
      %v530 = vpop.f32.mrb[0].mxu0
      %v531 = vadd.f32 0.0, %v530
      %v532 = vpop.f32.mrb[0].mxu0
      %533 = vmatprep.mubr.f32.mxu0 0.0
      %534 = vmatmul.mubr.f32.gmra.mrb[0].mxu0 %v406
      %v535 = vpop.f32.mrb[0].mxu0
      %v536 = vadd.f32 0.0, %v535
      %v537 = vpop.f32.mrb[0].mxu0
      %538 = vmatprep.mubr.f32.mxu0 0.0
      %539 = vmatmul.mubr.f32.gmra.mrb[0].mxu0 %v409
      %v540 = vpop.f32.mrb[0].mxu0
      %v541 = vadd.f32 0.0, %v540
      %v542 = vpop.f32.mrb[0].mxu0
      %543 = vmatprep.mubr.f32.mxu0 0.0
      %544 = vmatmul.mubr.f32.gmra.mrb[0].mxu0 %v412
      %v545 = vpop.f32.mrb[0].mxu0
      %v546 = vadd.f32 0.0, %v545
      %v547 = vpop.f32.mrb[0].mxu0
      %548 = vmatprep.mubr.f32.mxu0 0.0
      %549 = vmatmul.mubr.f32.gmra.mrb[0].mxu0 %v415
      %v550 = vpop.f32.mrb[0].mxu0
      %v551 = vadd.f32 0.0, %v550
      %v552 = vpop.f32.mrb[0].mxu0
      %553 = vmatprep.mubr.f32.mxu0 0.0
      %554 = vmatmul.mubr.f32.gmra.mrb[0].mxu0 %v418
      %v555 = vpop.f32.mrb[0].mxu0
      %v556 = vadd.f32 0.0, %v555
      %v557 = vpop.f32.mrb[0].mxu0
      %558 = vmatprep.mubr.f32.mxu0 0.0
      %559 = vmatmul.mubr.f32.gmra.mrb[0].mxu0 %v421
      %v560 = vpop.f32.mrb[0].mxu0
      %v561 = vadd.f32 0.0, %v560
      %v562 = vpop.f32.mrb[0].mxu0
      %563 = vmatprep.mubr.f32.mxu0 0.0
      %564 = vmatmul.mubr.f32.gmra.mrb[0].mxu0 %v424
      %v565 = vpop.f32.mrb[0].mxu0
      %v566 = vadd.f32 0.0, %v565
      %v567 = vpop.f32.mrb[0].mxu0
      %568 = vmatprep.mubr.f32.mxu0 0.0
      %569 = vmatmul.mubr.f32.gmra.mrb[0].mxu0 %v427
      %v570 = vpop.f32.mrb[0].mxu0
      %v571 = vadd.f32 0.0, %v570
      %v572 = vpop.f32.mrb[0].mxu0
      %573 = vdwg.mxu0
      %584 = vrot.lane.b32.xlu0 %v353, 1
      %v585 = vpop.permute.xlu0 %584
      %586 = vrot.lane.b32.xlu0 %v354, 1
      %v587 = vpop.permute.xlu0 %586
      %588 = vrot.lane.b32.xlu0 %v355, 1
      %v589 = vpop.permute.xlu0 %588
      %590 = vrot.lane.b32.xlu0 %v356, 1
      %v591 = vpop.permute.xlu0 %590
      %592 = vrot.lane.b32.xlu0 %v357, 1
      %v593 = vpop.permute.xlu0 %592
      %594 = vrot.lane.b32.xlu0 %v358, 1
      %v595 = vpop.permute.xlu0 %594
      %596 = vrot.lane.b32.xlu0 %v359, 1
      %v597 = vpop.permute.xlu0 %596
      %598 = vrot.lane.b32.xlu0 %v360, 1
      %v599 = vpop.permute.xlu0 %598
      %600 = vrot.lane.b32.xlu0 %v361, 1
      %v601 = vpop.permute.xlu0 %600
      %602 = vrot.lane.b32.xlu0 %v362, 1
      %v603 = vpop.permute.xlu0 %602
      %vm604 = vcmask 7168
      %v605 = vsel %vm604, %v585, %v587
      %v606 = vsel %vm604, %v589, %v591
      %v607 = vsel %vm604, %v593, %v595
      %v608 = vsel %vm604, %v597, %v599
      %v609 = vsel %vm604, %v601, %v603
      %v616 = vsel %vm380, %v337, 0
      %v619 = vsel %vm380, %v338, 0
      %v622 = vsel %vm380, %v339, 0
      %v625 = vsel %vm380, %v340, 0
      %v628 = vsel %vm380, %v341, 0
      %v631 = vsel %vm380, %v342, 0
      %v634 = vsel %vm380, %v343, 0
      %v637 = vsel %vm380, %v344, 0
      %v640 = vsel %vm380, %v345, 0
      %v643 = vsel %vm380, %v346, 0
      %v646 = vsel %vm380, %v347, 0
      %v649 = vsel %vm380, %v348, 0
      %v652 = vsel %vm380, %v349, 0
      %v655 = vsel %vm380, %v350, 0
      %v658 = vsel %vm380, %v351, 0
      %v661 = vsel %vm380, %v352, 0
      %663 = vmatprep.subr.mxu0 0.0
      %664 = vmatpush1.msra.mxu0 %v605
      %665 = vmatprep.subr.mxu0 0.0
      %666 = vmatpush1.msra.mxu0 %v606
      %667 = vmatprep.subr.mxu0 0.0
      %668 = vmatpush1.msra.mxu0 %v607
      %669 = vmatprep.subr.mxu0 0.0
      %670 = vmatpush1.msra.mxu0 %v608
      %671 = vmatprep.subr.mxu0 0.0
      %672 = vmatpush1.msra.mxu0 %v609
      %673 = vmatprep.subr.mxu0 0.0
      %674 = vmatpush1.msra.mxu0 0.0
      %675 = vmatprep.subr.mxu0 0.0
      %676 = vmatpush1.msra.mxu0 0.0
      %677 = vmatprep.subr.mxu0 0.0
      %678 = vmatpush1.msra.mxu0 0.0
      %679 = vmatprep.subr.mxu0 0.0
      %680 = vmatpush1.msra.mxu0 0.0
      %681 = vmatprep.subr.mxu0 0.0
      %682 = vmatpush1.msra.mxu0 0.0
      %683 = vmatprep.subr.mxu0 0.0
      %684 = vmatpush1.msra.mxu0 0.0
      %685 = vmatprep.subr.mxu0 0.0
      %686 = vmatpush1.msra.mxu0 0.0
      %687 = vmatprep.subr.mxu0 0.0
      %688 = vmatpush1.msra.mxu0 0.0
      %689 = vmatprep.subr.mxu0 0.0
      %690 = vmatpush1.msra.mxu0 0.0
      %691 = vmatprep.subr.mxu0 0.0
      %692 = vmatpush1.msra.mxu0 0.0
      %693 = vmatprep.subr.mxu0 0.0
      %694 = vmatpush1.msra.mxu0 0.0
      %695 = vmatprep.subr.mxu0 0.0
      %696 = vmatpush1.msra.mxu0 0.0
      %697 = vmatprep.subr.mxu0 0.0
      %698 = vmatpush1.msra.mxu0 0.0
      %699 = vmatprep.subr.mxu0 0.0
      %700 = vmatpush1.msra.mxu0 0.0
      %701 = vmatprep.subr.mxu0 0.0
      %702 = vmatpush1.msra.mxu0 0.0
      %703 = vmatprep.subr.mxu0 0.0
      %704 = vmatpush1.msra.mxu0 0.0
      %705 = vmatprep.subr.mxu0 0.0
      %706 = vmatpush1.msra.mxu0 0.0
      %707 = vmatprep.subr.mxu0 0.0
      %708 = vmatpush1.msra.mxu0 0.0
      %709 = vmatprep.subr.mxu0 0.0
      %710 = vmatpush1.msra.mxu0 0.0
      %711 = vmatprep.subr.mxu0 0.0
      %712 = vmatpush1.msra.mxu0 0.0
      %713 = vmatprep.subr.mxu0 0.0
      %714 = vmatpush1.msra.mxu0 0.0
      %715 = vmatprep.subr.mxu0 0.0
      %716 = vmatpush1.msra.mxu0 0.0
      %717 = vmatprep.subr.mxu0 0.0
      %718 = vmatpush1.msra.mxu0 0.0
      %719 = vmatprep.subr.mxu0 0.0
      %720 = vmatpush1.msra.mxu0 0.0
      %721 = vmatprep.subr.mxu0 0.0
      %722 = vmatpush1.msra.mxu0 0.0
      %723 = vmatprep.subr.mxu0 0.0
      %724 = vmatpush1.msra.mxu0 0.0
      %725 = vmatprep.subr.mxu0 0.0
      %726 = vmatpush1.msra.mxu0 0.0
      %727 = vmatprep.mubr.f32.mxu0 0.0
      %728 = vmatmul.mubr.f32.gmra.mrb[0].mxu0 %v616
      %v729 = vpop.f32.mrb[0].mxu0
      %v730 = vadd.f32 %v496, %v729
      %v731 = vpop.f32.mrb[0].mxu0
      %732 = vmatprep.mubr.f32.mxu0 0.0
      %733 = vmatmul.mubr.f32.gmra.mrb[0].mxu0 %v619
      %v734 = vpop.f32.mrb[0].mxu0
      %v735 = vadd.f32 %v501, %v734
      %v736 = vpop.f32.mrb[0].mxu0
      %737 = vmatprep.mubr.f32.mxu0 0.0
      %738 = vmatmul.mubr.f32.gmra.mrb[0].mxu0 %v622
      %v739 = vpop.f32.mrb[0].mxu0
      %v740 = vadd.f32 %v506, %v739
      %v741 = vpop.f32.mrb[0].mxu0
      %742 = vmatprep.mubr.f32.mxu0 0.0
      %743 = vmatmul.mubr.f32.gmra.mrb[0].mxu0 %v625
      %v744 = vpop.f32.mrb[0].mxu0
      %v745 = vadd.f32 %v511, %v744
      %v746 = vpop.f32.mrb[0].mxu0
      %747 = vmatprep.mubr.f32.mxu0 0.0
      %748 = vmatmul.mubr.f32.gmra.mrb[0].mxu0 %v628
      %v749 = vpop.f32.mrb[0].mxu0
      %v750 = vadd.f32 %v516, %v749
      %v751 = vpop.f32.mrb[0].mxu0
      %752 = vmatprep.mubr.f32.mxu0 0.0
      %753 = vmatmul.mubr.f32.gmra.mrb[0].mxu0 %v631
      %v754 = vpop.f32.mrb[0].mxu0
      %v755 = vadd.f32 %v521, %v754
      %v756 = vpop.f32.mrb[0].mxu0
      %757 = vmatprep.mubr.f32.mxu0 0.0
      %758 = vmatmul.mubr.f32.gmra.mrb[0].mxu0 %v634
      %v759 = vpop.f32.mrb[0].mxu0
      %v760 = vadd.f32 %v526, %v759
      %v761 = vpop.f32.mrb[0].mxu0
      %762 = vmatprep.mubr.f32.mxu0 0.0
      %763 = vmatmul.mubr.f32.gmra.mrb[0].mxu0 %v637
      %v764 = vpop.f32.mrb[0].mxu0
      %v765 = vadd.f32 %v531, %v764
      %v766 = vpop.f32.mrb[0].mxu0
      %767 = vmatprep.mubr.f32.mxu0 0.0
      %768 = vmatmul.mubr.f32.gmra.mrb[0].mxu0 %v640
      %v769 = vpop.f32.mrb[0].mxu0
      %v770 = vadd.f32 %v536, %v769
      %v771 = vpop.f32.mrb[0].mxu0
      %772 = vmatprep.mubr.f32.mxu0 0.0
      %773 = vmatmul.mubr.f32.gmra.mrb[0].mxu0 %v643
      %v774 = vpop.f32.mrb[0].mxu0
      %v775 = vadd.f32 %v541, %v774
      %v776 = vpop.f32.mrb[0].mxu0
      %777 = vmatprep.mubr.f32.mxu0 0.0
      %778 = vmatmul.mubr.f32.gmra.mrb[0].mxu0 %v646
      %v779 = vpop.f32.mrb[0].mxu0
      %v780 = vadd.f32 %v546, %v779
      %v781 = vpop.f32.mrb[0].mxu0
      %782 = vmatprep.mubr.f32.mxu0 0.0
      %783 = vmatmul.mubr.f32.gmra.mrb[0].mxu0 %v649
      %v784 = vpop.f32.mrb[0].mxu0
      %v785 = vadd.f32 %v551, %v784
      %v786 = vpop.f32.mrb[0].mxu0
      %787 = vmatprep.mubr.f32.mxu0 0.0
      %788 = vmatmul.mubr.f32.gmra.mrb[0].mxu0 %v652
      %v789 = vpop.f32.mrb[0].mxu0
      %v790 = vadd.f32 %v556, %v789
      %v791 = vpop.f32.mrb[0].mxu0
      %792 = vmatprep.mubr.f32.mxu0 0.0
      %793 = vmatmul.mubr.f32.gmra.mrb[0].mxu0 %v655
      %v794 = vpop.f32.mrb[0].mxu0
      %v795 = vadd.f32 %v561, %v794
      %v796 = vpop.f32.mrb[0].mxu0
      %797 = vmatprep.mubr.f32.mxu0 0.0
      %798 = vmatmul.mubr.f32.gmra.mrb[0].mxu0 %v658
      %v799 = vpop.f32.mrb[0].mxu0
      %v800 = vadd.f32 %v566, %v799
      %v801 = vpop.f32.mrb[0].mxu0
      %802 = vmatprep.mubr.f32.mxu0 0.0
      %803 = vmatmul.mubr.f32.gmra.mrb[0].mxu0 %v661
      %v804 = vpop.f32.mrb[0].mxu0
      %v805 = vadd.f32 %v571, %v804
      %v806 = vpop.f32.mrb[0].mxu0
      %807 = vdwg.mxu0
      %s808 = scalar_lea.vmem %s3, 256
      %v809 = vld [vmem:[%s808] sm:$0xff]
      %v810 = vld [vmem:[%s808 + $0x8] sm:$0xff]
      %v811 = vld [vmem:[%s808 + $0x10] sm:$0xff]
      %v812 = vld [vmem:[%s808 + $0x18] sm:$0xff]
      %v813 = vld [vmem:[%s808 + $0x20] sm:$0xff]
      %v814 = vld [vmem:[%s808 + $0x28] sm:$0xff]
      %v815 = vld [vmem:[%s808 + $0x30] sm:$0xff]
      %v816 = vld [vmem:[%s808 + $0x38] sm:$0xff]
      %v817 = vld [vmem:[%s808 + $0x40] sm:$0xff]
      %v818 = vld [vmem:[%s808 + $0x48] sm:$0xff]
      %v819 = vld [vmem:[%s808 + $0x50] sm:$0xff]
      %v820 = vld [vmem:[%s808 + $0x58] sm:$0xff]
      %v821 = vld [vmem:[%s808 + $0x60] sm:$0xff]
      %v822 = vld [vmem:[%s808 + $0x68] sm:$0xff]
      %v823 = vld [vmem:[%s808 + $0x70] sm:$0xff]
      %v824 = vld [vmem:[%s808 + $0x78] sm:$0xff]
      %v825 = vld [vmem:[#allocation2 + $0x8] sm:$0xff]
      %v826 = vld [vmem:[#allocation2 + $0x10] sm:$0xff]
      %v827 = vld [vmem:[#allocation2 + $0x20] sm:$0xff]
      %v828 = vld [vmem:[#allocation2 + $0x28] sm:$0xff]
      %v829 = vld [vmem:[#allocation2 + $0x38] sm:$0xff]
      %v830 = vld [vmem:[#allocation2 + $0x40] sm:$0xff]
      %v831 = vld [vmem:[#allocation2 + $0x50] sm:$0xff]
      %v832 = vld [vmem:[#allocation2 + $0x58] sm:$0xff]
      %v833 = vld [vmem:[#allocation2 + $0x68] sm:$0xff]
      %v834 = vld [vmem:[#allocation2 + $0x70] sm:$0xff]
      %845 = vrot.lane.b32.xlu0 %v825, 127
      %v846 = vpop.permute.xlu0 %845
      %847 = vrot.lane.b32.xlu0 %v826, 127
      %v848 = vpop.permute.xlu0 %847
      %849 = vrot.lane.b32.xlu0 %v827, 127
      %v850 = vpop.permute.xlu0 %849
      %851 = vrot.lane.b32.xlu0 %v828, 127
      %v852 = vpop.permute.xlu0 %851
      %853 = vrot.lane.b32.xlu0 %v829, 127
      %v854 = vpop.permute.xlu0 %853
      %855 = vrot.lane.b32.xlu0 %v830, 127
      %v856 = vpop.permute.xlu0 %855
      %857 = vrot.lane.b32.xlu0 %v831, 127
      %v858 = vpop.permute.xlu0 %857
      %859 = vrot.lane.b32.xlu0 %v832, 127
      %v860 = vpop.permute.xlu0 %859
      %861 = vrot.lane.b32.xlu0 %v833, 127
      %v862 = vpop.permute.xlu0 %861
      %863 = vrot.lane.b32.xlu0 %v834, 127
      %v864 = vpop.permute.xlu0 %863
      %vm865 = vcmask 1039360
      %v866 = vsel %vm865, %v846, %v848
      %v867 = vsel %vm865, %v850, %v852
      %v868 = vsel %vm865, %v854, %v856
      %v869 = vsel %vm865, %v858, %v860
      %v870 = vsel %vm865, %v862, %v864
      %v877 = vsel %vm380, %v809, 0
      %v880 = vsel %vm380, %v810, 0
      %v883 = vsel %vm380, %v811, 0
      %v886 = vsel %vm380, %v812, 0
      %v889 = vsel %vm380, %v813, 0
      %v892 = vsel %vm380, %v814, 0
      %v895 = vsel %vm380, %v815, 0
      %v898 = vsel %vm380, %v816, 0
      %v901 = vsel %vm380, %v817, 0
      %v904 = vsel %vm380, %v818, 0
      %v907 = vsel %vm380, %v819, 0
      %v910 = vsel %vm380, %v820, 0
      %v913 = vsel %vm380, %v821, 0
      %v916 = vsel %vm380, %v822, 0
      %v919 = vsel %vm380, %v823, 0
      %v922 = vsel %vm380, %v824, 0
      %924 = vmatprep.subr.mxu0 0.0
      %925 = vmatpush1.msra.mxu0 %v866
      %926 = vmatprep.subr.mxu0 0.0
      %927 = vmatpush1.msra.mxu0 %v867
      %928 = vmatprep.subr.mxu0 0.0
      %929 = vmatpush1.msra.mxu0 %v868
      %930 = vmatprep.subr.mxu0 0.0
      %931 = vmatpush1.msra.mxu0 %v869
      %932 = vmatprep.subr.mxu0 0.0
      %933 = vmatpush1.msra.mxu0 %v870
      %934 = vmatprep.subr.mxu0 0.0
      %935 = vmatpush1.msra.mxu0 0.0
      %936 = vmatprep.subr.mxu0 0.0
      %937 = vmatpush1.msra.mxu0 0.0
      %938 = vmatprep.subr.mxu0 0.0
      %939 = vmatpush1.msra.mxu0 0.0
      %940 = vmatprep.subr.mxu0 0.0
      %941 = vmatpush1.msra.mxu0 0.0
      %942 = vmatprep.subr.mxu0 0.0
      %943 = vmatpush1.msra.mxu0 0.0
      %944 = vmatprep.subr.mxu0 0.0
      %945 = vmatpush1.msra.mxu0 0.0
      %946 = vmatprep.subr.mxu0 0.0
      %947 = vmatpush1.msra.mxu0 0.0
      %948 = vmatprep.subr.mxu0 0.0
      %949 = vmatpush1.msra.mxu0 0.0
      %950 = vmatprep.subr.mxu0 0.0
      %951 = vmatpush1.msra.mxu0 0.0
      %952 = vmatprep.subr.mxu0 0.0
      %953 = vmatpush1.msra.mxu0 0.0
      %954 = vmatprep.subr.mxu0 0.0
      %955 = vmatpush1.msra.mxu0 0.0
      %956 = vmatprep.subr.mxu0 0.0
      %957 = vmatpush1.msra.mxu0 0.0
      %958 = vmatprep.subr.mxu0 0.0
      %959 = vmatpush1.msra.mxu0 0.0
      %960 = vmatprep.subr.mxu0 0.0
      %961 = vmatpush1.msra.mxu0 0.0
      %962 = vmatprep.subr.mxu0 0.0
      %963 = vmatpush1.msra.mxu0 0.0
      %964 = vmatprep.subr.mxu0 0.0
      %965 = vmatpush1.msra.mxu0 0.0
      %966 = vmatprep.subr.mxu0 0.0
      %967 = vmatpush1.msra.mxu0 0.0
      %968 = vmatprep.subr.mxu0 0.0
      %969 = vmatpush1.msra.mxu0 0.0
      %970 = vmatprep.subr.mxu0 0.0
      %971 = vmatpush1.msra.mxu0 0.0
      %972 = vmatprep.subr.mxu0 0.0
      %973 = vmatpush1.msra.mxu0 0.0
      %974 = vmatprep.subr.mxu0 0.0
      %975 = vmatpush1.msra.mxu0 0.0
      %976 = vmatprep.subr.mxu0 0.0
      %977 = vmatpush1.msra.mxu0 0.0
      %978 = vmatprep.subr.mxu0 0.0
      %979 = vmatpush1.msra.mxu0 0.0
      %980 = vmatprep.subr.mxu0 0.0
      %981 = vmatpush1.msra.mxu0 0.0
      %982 = vmatprep.subr.mxu0 0.0
      %983 = vmatpush1.msra.mxu0 0.0
      %984 = vmatprep.subr.mxu0 0.0
      %985 = vmatpush1.msra.mxu0 0.0
      %986 = vmatprep.subr.mxu0 0.0
      %987 = vmatpush1.msra.mxu0 0.0
      %988 = vmatprep.mubr.f32.mxu0 0.0
      %989 = vmatmul.mubr.f32.gmra.mrb[0].mxu0 %v877
      %v990 = vpop.f32.mrb[0].mxu0
      %v991 = vadd.f32 0.0, %v990
      %v992 = vpop.f32.mrb[0].mxu0
      %993 = vmatprep.mubr.f32.mxu0 0.0
      %994 = vmatmul.mubr.f32.gmra.mrb[0].mxu0 %v880
      %v995 = vpop.f32.mrb[0].mxu0
      %v996 = vadd.f32 0.0, %v995
      %v997 = vpop.f32.mrb[0].mxu0
      %998 = vmatprep.mubr.f32.mxu0 0.0
      %999 = vmatmul.mubr.f32.gmra.mrb[0].mxu0 %v883
      %v1000 = vpop.f32.mrb[0].mxu0
      %v1001 = vadd.f32 0.0, %v1000
      %v1002 = vpop.f32.mrb[0].mxu0
      %1003 = vmatprep.mubr.f32.mxu0 0.0
      %1004 = vmatmul.mubr.f32.gmra.mrb[0].mxu0 %v886
      %v1005 = vpop.f32.mrb[0].mxu0
      %v1006 = vadd.f32 0.0, %v1005
      %v1007 = vpop.f32.mrb[0].mxu0
      %1008 = vmatprep.mubr.f32.mxu0 0.0
      %1009 = vmatmul.mubr.f32.gmra.mrb[0].mxu0 %v889
      %v1010 = vpop.f32.mrb[0].mxu0
      %v1011 = vadd.f32 0.0, %v1010
      %v1012 = vpop.f32.mrb[0].mxu0
      %1013 = vmatprep.mubr.f32.mxu0 0.0
      %1014 = vmatmul.mubr.f32.gmra.mrb[0].mxu0 %v892
      %v1015 = vpop.f32.mrb[0].mxu0
      %v1016 = vadd.f32 0.0, %v1015
      %v1017 = vpop.f32.mrb[0].mxu0
      %1018 = vmatprep.mubr.f32.mxu0 0.0
      %1019 = vmatmul.mubr.f32.gmra.mrb[0].mxu0 %v895
      %v1020 = vpop.f32.mrb[0].mxu0
      %v1021 = vadd.f32 0.0, %v1020
      %v1022 = vpop.f32.mrb[0].mxu0
      %1023 = vmatprep.mubr.f32.mxu0 0.0
      %1024 = vmatmul.mubr.f32.gmra.mrb[0].mxu0 %v898
      %v1025 = vpop.f32.mrb[0].mxu0
      %v1026 = vadd.f32 0.0, %v1025
      %v1027 = vpop.f32.mrb[0].mxu0
      %1028 = vmatprep.mubr.f32.mxu0 0.0
      %1029 = vmatmul.mubr.f32.gmra.mrb[0].mxu0 %v901
      %v1030 = vpop.f32.mrb[0].mxu0
      %v1031 = vadd.f32 0.0, %v1030
      %v1032 = vpop.f32.mrb[0].mxu0
      %1033 = vmatprep.mubr.f32.mxu0 0.0
      %1034 = vmatmul.mubr.f32.gmra.mrb[0].mxu0 %v904
      %v1035 = vpop.f32.mrb[0].mxu0
      %v1036 = vadd.f32 0.0, %v1035
      %v1037 = vpop.f32.mrb[0].mxu0
      %1038 = vmatprep.mubr.f32.mxu0 0.0
      %1039 = vmatmul.mubr.f32.gmra.mrb[0].mxu0 %v907
      %v1040 = vpop.f32.mrb[0].mxu0
      %v1041 = vadd.f32 0.0, %v1040
      %v1042 = vpop.f32.mrb[0].mxu0
      %1043 = vmatprep.mubr.f32.mxu0 0.0
      %1044 = vmatmul.mubr.f32.gmra.mrb[0].mxu0 %v910
      %v1045 = vpop.f32.mrb[0].mxu0
      %v1046 = vadd.f32 0.0, %v1045
      %v1047 = vpop.f32.mrb[0].mxu0
      %1048 = vmatprep.mubr.f32.mxu0 0.0
      %1049 = vmatmul.mubr.f32.gmra.mrb[0].mxu0 %v913
      %v1050 = vpop.f32.mrb[0].mxu0
      %v1051 = vadd.f32 0.0, %v1050
      %v1052 = vpop.f32.mrb[0].mxu0
      %1053 = vmatprep.mubr.f32.mxu0 0.0
      %1054 = vmatmul.mubr.f32.gmra.mrb[0].mxu0 %v916
      %v1055 = vpop.f32.mrb[0].mxu0
      %v1056 = vadd.f32 0.0, %v1055
      %v1057 = vpop.f32.mrb[0].mxu0
      %1058 = vmatprep.mubr.f32.mxu0 0.0
      %1059 = vmatmul.mubr.f32.gmra.mrb[0].mxu0 %v919
      %v1060 = vpop.f32.mrb[0].mxu0
      %v1061 = vadd.f32 0.0, %v1060
      %v1062 = vpop.f32.mrb[0].mxu0
      %1063 = vmatprep.mubr.f32.mxu0 0.0
      %1064 = vmatmul.mubr.f32.gmra.mrb[0].mxu0 %v922
      %v1065 = vpop.f32.mrb[0].mxu0
      %v1066 = vadd.f32 0.0, %v1065
      %v1067 = vpop.f32.mrb[0].mxu0
      %1068 = vdwg.mxu0
      %v1069 = vadd.f32 %v730, %v991
      %v1070 = vadd.f32 %v735, %v996
      %v1071 = vadd.f32 %v740, %v1001
      %v1072 = vadd.f32 %v745, %v1006
      %v1073 = vadd.f32 %v750, %v1011
      %v1074 = vadd.f32 %v755, %v1016
      %v1075 = vadd.f32 %v760, %v1021
      %v1076 = vadd.f32 %v765, %v1026
      %v1077 = vadd.f32 %v770, %v1031
      %v1078 = vadd.f32 %v775, %v1036
      %v1079 = vadd.f32 %v780, %v1041
      %v1080 = vadd.f32 %v785, %v1046
      %v1081 = vadd.f32 %v790, %v1051
      %v1082 = vadd.f32 %v795, %v1056
      %v1083 = vadd.f32 %v800, %v1061
      %v1084 = vadd.f32 %v805, %v1066
      %v1085 = vld [vmem:[%s4] sm:$0xff]
      %v1086 = vld [vmem:[%s4 + $0x8] sm:$0xff]
      %v1087 = vld [vmem:[%s4 + $0x10] sm:$0xff]
      %v1088 = vld [vmem:[%s4 + $0x18] sm:$0xff]
      %v1089 = vld [vmem:[%s4 + $0x20] sm:$0xff]
      %v1090 = vld [vmem:[%s4 + $0x28] sm:$0xff]
      %v1091 = vld [vmem:[%s4 + $0x30] sm:$0xff]
      %v1092 = vld [vmem:[%s4 + $0x38] sm:$0xff]
      %v1093 = vld [vmem:[%s4 + $0x40] sm:$0xff]
      %v1094 = vld [vmem:[%s4 + $0x48] sm:$0xff]
      %v1095 = vld [vmem:[%s4 + $0x50] sm:$0xff]
      %v1096 = vld [vmem:[%s4 + $0x58] sm:$0xff]
      %v1097 = vld [vmem:[%s4 + $0x60] sm:$0xff]
      %v1098 = vld [vmem:[%s4 + $0x68] sm:$0xff]
      %v1099 = vld [vmem:[%s4 + $0x70] sm:$0xff]
      %v1100 = vld [vmem:[%s4 + $0x78] sm:$0xff]
      %1102 = vset.pattern.permute.xlu0 0
      %1103 = vperm.xlu0 %1102, %v1085
      %v1104 = vpop.permute.xlu0 %1103
      %1107 = vset.pattern.permute.xlu0 0
      %1108 = vperm.xlu0 %1107, %v1086
      %v1109 = vpop.permute.xlu0 %1108
      %1112 = vset.pattern.permute.xlu0 0
      %1113 = vperm.xlu0 %1112, %v1087
      %v1114 = vpop.permute.xlu0 %1113
      %1117 = vset.pattern.permute.xlu0 0
      %1118 = vperm.xlu0 %1117, %v1088
      %v1119 = vpop.permute.xlu0 %1118
      %1122 = vset.pattern.permute.xlu0 0
      %1123 = vperm.xlu0 %1122, %v1089
      %v1124 = vpop.permute.xlu0 %1123
      %1127 = vset.pattern.permute.xlu0 0
      %1128 = vperm.xlu0 %1127, %v1090
      %v1129 = vpop.permute.xlu0 %1128
      %1132 = vset.pattern.permute.xlu0 0
      %1133 = vperm.xlu0 %1132, %v1091
      %v1134 = vpop.permute.xlu0 %1133
      %1137 = vset.pattern.permute.xlu0 0
      %1138 = vperm.xlu0 %1137, %v1092
      %v1139 = vpop.permute.xlu0 %1138
      %1142 = vset.pattern.permute.xlu0 0
      %1143 = vperm.xlu0 %1142, %v1093
      %v1144 = vpop.permute.xlu0 %1143
      %1147 = vset.pattern.permute.xlu0 0
      %1148 = vperm.xlu0 %1147, %v1094
      %v1149 = vpop.permute.xlu0 %1148
      %1152 = vset.pattern.permute.xlu0 0
      %1153 = vperm.xlu0 %1152, %v1095
      %v1154 = vpop.permute.xlu0 %1153
      %1157 = vset.pattern.permute.xlu0 0
      %1158 = vperm.xlu0 %1157, %v1096
      %v1159 = vpop.permute.xlu0 %1158
      %1162 = vset.pattern.permute.xlu0 0
      %1163 = vperm.xlu0 %1162, %v1097
      %v1164 = vpop.permute.xlu0 %1163
      %1167 = vset.pattern.permute.xlu0 0
      %1168 = vperm.xlu0 %1167, %v1098
      %v1169 = vpop.permute.xlu0 %1168
      %1172 = vset.pattern.permute.xlu0 0
      %1173 = vperm.xlu0 %1172, %v1099
      %v1174 = vpop.permute.xlu0 %1173
      %1177 = vset.pattern.permute.xlu0 0
      %1178 = vperm.xlu0 %1177, %v1100
      %v1179 = vpop.permute.xlu0 %1178
      %v1181 = vadd.f32 %v1069, %v1104
      %v1182 = vadd.f32 %v1070, %v1109
      %v1183 = vadd.f32 %v1071, %v1114
      %v1184 = vadd.f32 %v1072, %v1119
      %v1185 = vadd.f32 %v1073, %v1124
      %v1186 = vadd.f32 %v1074, %v1129
      %v1187 = vadd.f32 %v1075, %v1134
      %v1188 = vadd.f32 %v1076, %v1139
      %v1189 = vadd.f32 %v1077, %v1144
      %v1190 = vadd.f32 %v1078, %v1149
      %v1191 = vadd.f32 %v1079, %v1154
      %v1192 = vadd.f32 %v1080, %v1159
      %v1193 = vadd.f32 %v1081, %v1164
      %v1194 = vadd.f32 %v1082, %v1169
      %v1195 = vadd.f32 %v1083, %v1174
      %v1196 = vadd.f32 %v1084, %v1179
      %v1197 = vmul.f32 %v1181, 0.5
      %v1198 = vmul.f32 %v1182, 0.5
      %v1199 = vmul.f32 %v1183, 0.5
      %v1200 = vmul.f32 %v1184, 0.5
      %v1201 = vtanh.pop %v1197
      %v1202 = vtanh.pop %v1198
      %v1203 = vtanh.pop %v1199
      %v1204 = vtanh.pop %v1200
      %v1205 = vmul.f32 %v1201, 0.5
      %v1206 = vmul.f32 %v1202, 0.5
      %v1207 = vmul.f32 %v1203, 0.5
      %v1208 = vmul.f32 %v1204, 0.5
      %v1209 = vadd.f32 %v1205, 0.5
      %v1210 = vadd.f32 %v1206, 0.5
      %v1211 = vadd.f32 %v1207, 0.5
      %v1212 = vadd.f32 %v1208, 0.5
      %v1213 = vmul.f32 %v1185, 0.5
      %v1214 = vmul.f32 %v1186, 0.5
      %v1215 = vmul.f32 %v1187, 0.5
      %v1216 = vmul.f32 %v1188, 0.5
      %v1217 = vtanh.pop %v1213
      %v1218 = vtanh.pop %v1214
      %v1219 = vtanh.pop %v1215
      %v1220 = vtanh.pop %v1216
      %v1221 = vmul.f32 %v1217, 0.5
      %v1222 = vmul.f32 %v1218, 0.5
      %v1223 = vmul.f32 %v1219, 0.5
      %v1224 = vmul.f32 %v1220, 0.5
      %v1225 = vadd.f32 %v1221, 0.5
      %v1226 = vadd.f32 %v1222, 0.5
      %v1227 = vadd.f32 %v1223, 0.5
      %v1228 = vadd.f32 %v1224, 0.5
      %v1229 = vmul.f32 %v1189, 0.5
      %v1230 = vmul.f32 %v1190, 0.5
      %v1231 = vmul.f32 %v1191, 0.5
      %v1232 = vmul.f32 %v1192, 0.5
      %v1233 = vtanh.pop %v1229
      %v1234 = vtanh.pop %v1230
      %v1235 = vtanh.pop %v1231
      %v1236 = vtanh.pop %v1232
      %v1237 = vmul.f32 %v1233, 0.5
      %v1238 = vmul.f32 %v1234, 0.5
      %v1239 = vmul.f32 %v1235, 0.5
      %v1240 = vmul.f32 %v1236, 0.5
      %v1241 = vadd.f32 %v1237, 0.5
      %v1242 = vadd.f32 %v1238, 0.5
      %v1243 = vadd.f32 %v1239, 0.5
      %v1244 = vadd.f32 %v1240, 0.5
      %v1245 = vtanh.pop %v1193
      %v1246 = vtanh.pop %v1194
      %v1247 = vtanh.pop %v1195
      %v1248 = vtanh.pop %v1196
      %v1249 = vld [vmem:[#allocation3] sm:$0xff]
      %v1250 = vld [vmem:[#allocation3 + $0x8] sm:$0xff]
      %v1251 = vld [vmem:[#allocation3 + $0x10] sm:$0xff]
      %v1252 = vld [vmem:[#allocation3 + $0x18] sm:$0xff]
      %v1253 = vmul.f32 %v1225, %v1249
      %v1254 = vmul.f32 %v1226, %v1250
      %v1255 = vmul.f32 %v1227, %v1251
      %v1256 = vmul.f32 %v1228, %v1252
      %v1257 = vmul.f32 %v1209, %v1245
      %v1258 = vmul.f32 %v1210, %v1246
      %v1259 = vmul.f32 %v1211, %v1247
      %v1260 = vmul.f32 %v1212, %v1248
      %v1261 = vadd.f32 %v1253, %v1257
      %v1262 = vadd.f32 %v1254, %v1258
      %v1263 = vadd.f32 %v1255, %v1259
      %v1264 = vadd.f32 %v1256, %v1260
      %v1265 = vtanh.pop %v1261
      %v1266 = vtanh.pop %v1262
      %v1267 = vtanh.pop %v1263
      %v1268 = vtanh.pop %v1264
      %v1269 = vmul.f32 %v1241, %v1265
      %v1270 = vmul.f32 %v1242, %v1266
      %v1271 = vmul.f32 %v1243, %v1267
      %v1272 = vmul.f32 %v1244, %v1268
      %1273 = vst.msk [vmem:[%s296] sm:$0xff] %vm309, %v1269
      %1274 = vst.msk [vmem:[%s296 + $0x8] sm:$0xff] %vm309, %v1270
      %1275 = vst.msk [vmem:[%s296 + $0x10] sm:$0xff] %vm309, %v1271
      %1276 = vst.msk [vmem:[%s296 + $0x18] sm:$0xff] %vm309, %v1272
      %1277 = vst.msk [vmem:[%s301] sm:$0xff] %vm309, %v1261
      %1278 = vst.msk [vmem:[%s301 + $0x8] sm:$0xff] %vm309, %v1262
      %1279 = vst.msk [vmem:[%s301 + $0x10] sm:$0xff] %vm309, %v1263
      %1280 = vst.msk [vmem:[%s301 + $0x18] sm:$0xff] %vm309, %v1264
      %p1281 = scmp.lt.s32.totalorder %s18, 1
      %s1282 = scalar_select %p1281, %s18, 1
      %s1283 = smul.addr %s1282, 4
      %s1284 = smul.addr %s1283, 8
      %s1285 = scalar_lea.vmem %s5, %s1284
      %p1286 = scmp.lt.s32.totalorder %s18, 1
      %s1287 = scalar_select %p1286, %s18, 1
      %s1288 = smul.addr %s1287, 4
      %s1289 = smul.addr %s1288, 8
      %s1290 = scalar_lea.vmem %s6, %s1289
      // Predicated region
      $region41: #{convlstm1d_forward.1} parent=39 // pred_check
        %p1291 = pneg %p156
      $region42: #{convlstm1d_forward.1} parent=39 // pred_check_branch
        %1293 = sbr.rel (%p1291) target = $region44
      $region43: #{convlstm1d_forward.1} parent=39 // pred_region
        _
      $region44: #{convlstm1d_forward.1} parent=39 // pred_fallthru
        _
      // Predicated region
      $region45: #{convlstm1d_forward.1} parent=39 // pred_check
        %p1294 = pneg %p182
      $region46: #{convlstm1d_forward.1} parent=39 // pred_check_branch
        %1296 = sbr.rel (%p1294) target = $region48
      $region47: #{convlstm1d_forward.1} parent=39 // pred_region
        _
      $region48: #{convlstm1d_forward.1} parent=39 // pred_fallthru
        _
    $region40: #{convlstm1d_forward.1} parent=5 // pred_fallthru
      _
    %p1297 = scmp.le.s32.totalorder 2, %s13
    // Predicated region
    $region49: #{convlstm1d_forward.1} parent=5 // pred_check
      %p1298 = pneg %p1297
    $region50: #{convlstm1d_forward.1} parent=5 // pred_check_branch
      %1300 = sbr.rel (%p1298) target = $region52
    $region51: #{convlstm1d_forward.1} parent=5 // pred_region
      %s1301 = ssub.s32 %s13, 2
      // Predicated region
      $region53: #{convlstm1d_forward.1} parent=51 // pred_check
        %p1302 = pneg %p162
      $region54: #{convlstm1d_forward.1} parent=51 // pred_check_branch
        %1304 = sbr.rel (%p1302) target = $region56
      $region55: #{convlstm1d_forward.1} parent=51 // pred_region
        %p1305 = scmp.lt.s32.totalorder %s19, 1
        %s1306 = scalar_select %p1305, %s19, 1
        %s1307 = smul.addr %s1306, 4
        %s1308 = smul.addr %s1307, 8
        %s1309 = scalar_lea.vmem %s5, %s1308
      $region56: #{convlstm1d_forward.1} parent=51 // pred_fallthru
        _
      // Predicated region
      $region57: #{convlstm1d_forward.1} parent=51 // pred_check
        %p1310 = pneg %p188
      $region58: #{convlstm1d_forward.1} parent=51 // pred_check_branch
        %1312 = sbr.rel (%p1310) target = $region60
      $region59: #{convlstm1d_forward.1} parent=51 // pred_region
        %p1313 = scmp.lt.s32.totalorder %s19, 1
        %s1314 = scalar_select %p1313, %s19, 1
        %s1315 = smul.addr %s1314, 4
        %s1316 = smul.addr %s1315, 8
        %s1317 = scalar_lea.vmem %s6, %s1316
      $region60: #{convlstm1d_forward.1} parent=51 // pred_fallthru
        _
    $region52: #{convlstm1d_forward.1} parent=5 // pred_fallthru
      _
  $region6: #{convlstm1d_forward.1} parent=0 // loop_footer
    %s17 = sadd.s32 1, %s13
  $region7: #{convlstm1d_forward.1} parent=0 // loop_footer_branch
    %12 = sbr.rel target = $region3
  $region8: #{convlstm1d_forward.1} parent=0 // loop_exit
    _

</llo_original>
